<compile_context>
chip_gen: v7x
topology: tpu7x:2x2x1
jax: 0.10.0
libtpu: 0.0.40
codegen_flags: <defaults>
</compile_context>

<pallas_src>
import functools

import jax
import jax.numpy as jnp
from jax.experimental import pallas as pl
from jax.experimental.pallas import tpu as pltpu

_LANE = 128


def _round_up(x, m):
    return ((x + m - 1) // m) * m


def actor_kernel(x_ref, w1_ref, b1_ref, w2_ref, b2_ref, w3_ref, b3_ref, o_ref,
                 *, layer1_on_mxu):
    """Fused fc1+relu, fc2+relu, fc3+tanh for one batch tile."""
    x = x_ref[...]                                    # (TB, S) f32
    S = x.shape[1]

    # ---- layer 1 ----------------------------------------------------------
    if layer1_on_mxu:
        # Large tile (or large S): MXU contraction (K padded internally by
        # Mosaic) keeps the VALU slots free for the casts/relu/bias work.
        h1 = jnp.dot(x, w1_ref[...],
                     preferred_element_type=jnp.float32) + b1_ref[...]
    else:
        # Tiny tile, tiny K: S broadcast-FMAs on the VPU beat a K-padded MXU
        # pass on the launch-latency critical path.  w1 is f32 — no cast.
        w1 = w1_ref[...]                              # (S, F1) f32
        h1 = b1_ref[...] + x[:, 0:1] * w1[0:1, :]
        for k in range(1, S):                         # static unroll, S tiny
            h1 = h1 + x[:, k:k + 1] * w1[k:k + 1, :]
    h1 = jnp.maximum(h1, 0.0)                         # relu (f32 VPU)

    # ---- layer 2 (MXU: bf16 in, f32 accumulate) ----------------------------
    h2 = jnp.dot(h1.astype(jnp.bfloat16), w2_ref[...],
                 preferred_element_type=jnp.float32) + b2_ref[...]
    h2 = jnp.maximum(h2, 0.0)                         # relu

    # ---- layer 3 (+ tanh on the EUP) ----------------------------------------
    h3 = jnp.dot(h2.astype(jnp.bfloat16), w3_ref[...],
                 preferred_element_type=jnp.float32) + b3_ref[...]
    o_ref[...] = jnp.tanh(h3).astype(o_ref.dtype)


def init_actor_params(key, state_size, action_size, fc1_units=400, fc2_units=300):
    """f32 params in (in, out) layout, mirroring nn.Linear default init
    U(-1/sqrt(fan_in), 1/sqrt(fan_in))."""
    def linear(k, fan_in, fan_out):
        kw, kb = jax.random.split(k)
        bound = 1.0 / jnp.sqrt(jnp.float32(fan_in))
        w = jax.random.uniform(kw, (fan_in, fan_out), jnp.float32, -bound, bound)
        b = jax.random.uniform(kb, (1, fan_out), jnp.float32, -bound, bound)
        return w, b

    k1, k2, k3 = jax.random.split(key, 3)
    w1, b1 = linear(k1, state_size, fc1_units)
    w2, b2 = linear(k2, fc1_units, fc2_units)
    w3, b3 = linear(k3, fc2_units, action_size)
    return (w1, b1, w2, b2, w3, b3)


def prepare_kernel_params(params):
    """One-time conversion for the kernel:
      * w2/w3 -> bf16 (halves the dominant weight DMA); w1 & all biases stay f32.
      * action dim zero-padded to a multiple of 128 (lane-dense output store);
        padded outputs are tanh(0)=0 and get sliced off -> semantics preserved.
      * hidden dims (400/300) intentionally left unpadded in HBM."""
    w1, b1, w2, b2, w3, b3 = params
    a = w3.shape[1]
    a_pad = _round_up(a, _LANE)
    w3p = jnp.zeros((w3.shape[0], a_pad), jnp.float32).at[:, :a].set(w3)
    b3p = jnp.zeros((1, a_pad), jnp.float32).at[:, :a].set(b3)
    return (w1.astype(jnp.float32), b1.astype(jnp.float32),
            w2.astype(jnp.bfloat16), b2.astype(jnp.float32),
            w3p.astype(jnp.bfloat16), b3p.astype(jnp.float32))


def _use_mxu_for_layer1(tb, s):
    """VPU broadcast-FMA for tiny tiles / tiny K; MXU once the tile is big
    enough that the FMA chain would bind VALU.  Keep the VPU path on v5e
    (128x128 MXU is closer to VE saturation there)."""
    if s > 16:
        return True
    if tb < 256:
        return False
    try:
        if "v5" in jax.devices()[0].device_kind.lower():
            return False
    except Exception:
        pass
    return True


@functools.partial(
    jax.jit,
    static_argnames=("action_size", "batch_tile", "single_buffer_weights"))
def _actor_forward(state, kparams, *, action_size, batch_tile,
                   single_buffer_weights):
    w1, b1, w2, b2, w3, b3 = kparams
    B, S = state.shape
    F1 = w1.shape[1]
    F2 = w2.shape[1]
    A_pad = w3.shape[1]

    # ---- batch tiling -------------------------------------------------------
    if B <= batch_tile:
        TB, Bp = B, B                      # single block, grid=(1,)
    else:
        # Even number of grid steps so ("parallel",) splits the batch across
        # both TensorCores on v7x (harmless on 1-TC v5e/v6e).  TB is a multiple
        # of 8; ~2048-row tiles amortize the ~0.35 us per-step pipeline cost
        # and fill the 256-wide MXU, while staying far under the VMEM limit.
        steps = 2 * pl.cdiv(B, 2 * batch_tile)
        TB = _round_up(pl.cdiv(B, steps), 8)
        Bp = TB * steps
        if Bp != B:
            state = jnp.pad(state, ((0, Bp - B), (0, 0)))
    grid = (Bp // TB,)

    layer1_on_mxu = _use_mxu_for_layer1(TB, S)
    large_batch = B > batch_tile
    # Large-B path: store the padded output in bf16 to halve the
    # write-amplified HBM stream (tanh output in [-1,1], <=~4e-3 abs rounding).
    out_dtype = jnp.bfloat16 if large_batch else jnp.float32
    out_bytes = 2 if large_batch else 4

    def resident(shape):
        # Constant index_map => block fetched once and stays VMEM-resident
        # across the whole grid; a single buffer is enough (frees the second
        # copy the default double-buffering would allocate).
        idx_map = lambda i: (0,) * len(shape)
        if single_buffer_weights:
            return pl.BlockSpec(shape, idx_map, pipeline_mode=pl.Buffered(1))
        return pl.BlockSpec(shape, idx_map)

    flops = 2 * Bp * (S * F1 + F1 * F2 + F2 * A_pad)
    bytes_accessed = (Bp * S * 4
                      + w1.size * 4 + w2.size * 2 + w3.size * 2
                      + (b1.size + b2.size + b3.size) * 4
                      + Bp * A_pad * out_bytes)

    out = pl.pallas_call(
        functools.partial(actor_kernel, layer1_on_mxu=layer1_on_mxu),
        out_shape=jax.ShapeDtypeStruct((Bp, A_pad), out_dtype),
        grid=grid,
        in_specs=[
            pl.BlockSpec((TB, S), lambda i: (i, 0)),
            resident(w1.shape), resident(b1.shape),
            resident(w2.shape), resident(b2.shape),
            resident(w3.shape), resident(b3.shape),
        ],
        out_specs=pl.BlockSpec((TB, A_pad), lambda i: (i, 0)),
        compiler_params=pltpu.CompilerParams(
            dimension_semantics=("parallel",)),
        cost_estimate=pl.CostEstimate(
            flops=flops, transcendentals=Bp * A_pad,
            bytes_accessed=bytes_accessed),
    )(state, w1, b1, w2, b2, w3, b3)

    return out[:B, :action_size].astype(jnp.float32)


_WEIGHT_SINGLE_BUFFER = None  # resolved on first call


def actor_forward(state, kparams, *, action_size, batch_tile=2048):
    """Public entry point.  Tries single-buffered resident weight blocks first
    (small VMEM saving); falls back to default buffering if the installed
    Pallas/Mosaic rejects pipeline_mode=Buffered(1)."""
    global _WEIGHT_SINGLE_BUFFER
    if _WEIGHT_SINGLE_BUFFER is None:
        try:
            out = _actor_forward(state, kparams, action_size=action_size,
                                 batch_tile=batch_tile,
                                 single_buffer_weights=True)
            jax.block_until_ready(out)
            _WEIGHT_SINGLE_BUFFER = True
            return out
        except Exception:
            _WEIGHT_SINGLE_BUFFER = False
    return _actor_forward(state, kparams, action_size=action_size,
                          batch_tile=batch_tile,
                          single_buffer_weights=_WEIGHT_SINGLE_BUFFER)


def actor_reference(state, kparams):
    """Pure-JAX reference computed with the same kernel params (f32 layer 1,
    bf16 layer-2/3 inputs, f32 accumulation)."""
    w1, b1, w2, b2, w3, b3 = kparams
    h1 = jnp.maximum(state @ w1 + b1, 0.0)
    h2 = jnp.maximum(
        jnp.dot(h1.astype(jnp.bfloat16), w2,
                preferred_element_type=jnp.float32) + b2, 0.0)
    h3 = jnp.dot(h2.astype(jnp.bfloat16), w3,
                 preferred_element_type=jnp.float32) + b3
    return jnp.tanh(h3)


if __name__ == "__main__":
    # Pendulum-v1-like sizes: state_size=3, action_size=1.
    B, STATE, ACTION = 2, 3, 1
    FC1, FC2 = 400, 300

    key = jax.random.PRNGKey(0)
    kp, kx, kx_big = jax.random.split(key, 3)
    params = init_actor_params(kp, STATE, ACTION, FC1, FC2)
    kparams = prepare_kernel_params(params)          # one-time weight prep

    # --- tiny-batch RL path: single block, VPU layer 1, f32 output ----------
    state = jax.random.normal(kx, (B, STATE), jnp.float32)
    out = jax.block_until_ready(actor_forward(state, kparams, action_size=ACTION))
    ref = actor_reference(state, kparams)[:, :ACTION]
    assert out.shape == (B, ACTION)
    assert jnp.allclose(out, ref, atol=2e-3, rtol=2e-3)

    # --- batched path: even 2-step parallel grid, MXU layer 1, bf16 output --
    BIG = 4096
    state_big = jax.random.normal(kx_big, (BIG, STATE), jnp.float32)
    out_big = jax.block_until_ready(
        actor_forward(state_big, kparams, action_size=ACTION, batch_tile=2048))
    ref_big = actor_reference(state_big, kparams)[:, :ACTION]
    assert out_big.shape == (BIG, ACTION)
    assert jnp.allclose(out_big, ref_big, atol=1e-2, rtol=1e-2)

    print("KERNEL_OK")
</pallas_src>

<mosaic_0001>
module attributes {stable_mosaic.version = 11 : i64} {
  func.func @actor_kernel(%arg0: i32, %arg1: memref<2x3xf32, #tpu.memory_space<vmem>>, %arg2: memref<3x400xf32, #tpu.memory_space<vmem>>, %arg3: memref<1x400xf32, #tpu.memory_space<vmem>>, %arg4: memref<400x300xbf16, #tpu.memory_space<vmem>>, %arg5: memref<1x300xf32, #tpu.memory_space<vmem>>, %arg6: memref<300x128xbf16, #tpu.memory_space<vmem>>, %arg7: memref<1x128xf32, #tpu.memory_space<vmem>>, %arg8: memref<2x128xf32, #tpu.memory_space<vmem>>) attributes {dimension_semantics = [#tpu.dimension_semantics<parallel>], iteration_bounds = array<i64: 1>, scalar_prefetch = 0 : i64, scratch_operands = 0 : i64, tpu.core_type = #tpu.core_type<tc>, window_params = [{transform_indices = @transform_0, window_bounds = array<i64: 2, 3>}, {pipeline_mode = #tpu.pipeline_mode<synchronous>, transform_indices = @transform_1, window_bounds = array<i64: 3, 400>}, {pipeline_mode = #tpu.pipeline_mode<synchronous>, transform_indices = @transform_2, window_bounds = array<i64: 1, 400>}, {pipeline_mode = #tpu.pipeline_mode<synchronous>, transform_indices = @transform_3, window_bounds = array<i64: 400, 300>}, {pipeline_mode = #tpu.pipeline_mode<synchronous>, transform_indices = @transform_4, window_bounds = array<i64: 1, 300>}, {pipeline_mode = #tpu.pipeline_mode<synchronous>, transform_indices = @transform_5, window_bounds = array<i64: 300, 128>}, {pipeline_mode = #tpu.pipeline_mode<synchronous>, transform_indices = @transform_6, window_bounds = array<i64: 1, 128>}, {transform_indices = @transform_7, window_bounds = array<i64: 2, 128>}]} {
    %c0 = arith.constant 0 : index
    %c0_0 = arith.constant 0 : index
    %0 = vector.load %arg1[%c0, %c0_0] : memref<2x3xf32, #tpu.memory_space<vmem>>, vector<2x3xf32>
    %c0_1 = arith.constant 0 : index
    %c0_2 = arith.constant 0 : index
    %1 = vector.load %arg2[%c0_1, %c0_2] : memref<3x400xf32, #tpu.memory_space<vmem>>, vector<3x400xf32>
    %c0_3 = arith.constant 0 : index
    %c0_4 = arith.constant 0 : index
    %2 = vector.load %arg3[%c0_3, %c0_4] : memref<1x400xf32, #tpu.memory_space<vmem>>, vector<1x400xf32>
    %3 = vector.extract_strided_slice %0 {offsets = [0, 0], sizes = [2, 1], strides = [1, 1]} : vector<2x3xf32> to vector<2x1xf32>
    %4 = vector.extract_strided_slice %1 {offsets = [0, 0], sizes = [1, 400], strides = [1, 1]} : vector<3x400xf32> to vector<1x400xf32>
    %5 = vector.broadcast %3 : vector<2x1xf32> to vector<2x400xf32>
    %6 = vector.broadcast %4 : vector<1x400xf32> to vector<2x400xf32>
    %7 = arith.mulf %5, %6 : vector<2x400xf32>
    %8 = vector.broadcast %2 : vector<1x400xf32> to vector<2x400xf32>
    %9 = arith.addf %8, %7 : vector<2x400xf32>
    %10 = vector.extract_strided_slice %0 {offsets = [0, 1], sizes = [2, 1], strides = [1, 1]} : vector<2x3xf32> to vector<2x1xf32>
    %11 = vector.extract_strided_slice %1 {offsets = [1, 0], sizes = [1, 400], strides = [1, 1]} : vector<3x400xf32> to vector<1x400xf32>
    %12 = vector.broadcast %10 : vector<2x1xf32> to vector<2x400xf32>
    %13 = vector.broadcast %11 : vector<1x400xf32> to vector<2x400xf32>
    %14 = arith.mulf %12, %13 : vector<2x400xf32>
    %15 = arith.addf %9, %14 : vector<2x400xf32>
    %16 = vector.extract_strided_slice %0 {offsets = [0, 2], sizes = [2, 1], strides = [1, 1]} : vector<2x3xf32> to vector<2x1xf32>
    %17 = vector.extract_strided_slice %1 {offsets = [2, 0], sizes = [1, 400], strides = [1, 1]} : vector<3x400xf32> to vector<1x400xf32>
    %18 = vector.broadcast %16 : vector<2x1xf32> to vector<2x400xf32>
    %19 = vector.broadcast %17 : vector<1x400xf32> to vector<2x400xf32>
    %20 = arith.mulf %18, %19 : vector<2x400xf32>
    %21 = arith.addf %15, %20 : vector<2x400xf32>
    %cst = arith.constant 0.000000e+00 : f32
    %22 = vector.broadcast %cst : f32 to vector<2x400xf32>
    %23 = arith.maximumf %21, %22 : vector<2x400xf32>
    %24 = arith.truncf %23 : vector<2x400xf32> to vector<2x400xbf16>
    %c0_5 = arith.constant 0 : index
    %c0_6 = arith.constant 0 : index
    %25 = vector.load %arg4[%c0_5, %c0_6] : memref<400x300xbf16, #tpu.memory_space<vmem>>, vector<400x300xbf16>
    %cst_7 = arith.constant dense<0.000000e+00> : vector<2x300xf32>
    %26 = tpu.matmul %24, %25, %cst_7 {dimension_numbers = #tpu.dot_dimension_numbers<[1], [0], [0], [1], [0, 0, 1, 1], [], []>} : vector<2x400xbf16>, vector<400x300xbf16>, vector<2x300xf32> -> vector<2x300xf32>
    %c0_8 = arith.constant 0 : index
    %c0_9 = arith.constant 0 : index
    %27 = vector.load %arg5[%c0_8, %c0_9] : memref<1x300xf32, #tpu.memory_space<vmem>>, vector<1x300xf32>
    %28 = vector.broadcast %27 : vector<1x300xf32> to vector<2x300xf32>
    %29 = arith.addf %26, %28 : vector<2x300xf32>
    %cst_10 = arith.constant 0.000000e+00 : f32
    %30 = vector.broadcast %cst_10 : f32 to vector<2x300xf32>
    %31 = arith.maximumf %29, %30 : vector<2x300xf32>
    %32 = arith.truncf %31 : vector<2x300xf32> to vector<2x300xbf16>
    %c0_11 = arith.constant 0 : index
    %c0_12 = arith.constant 0 : index
    %33 = vector.load %arg6[%c0_11, %c0_12] : memref<300x128xbf16, #tpu.memory_space<vmem>>, vector<300x128xbf16>
    %cst_13 = arith.constant dense<0.000000e+00> : vector<2x128xf32>
    %34 = tpu.matmul %32, %33, %cst_13 {dimension_numbers = #tpu.dot_dimension_numbers<[1], [0], [0], [1], [0, 0, 1, 1], [], []>} : vector<2x300xbf16>, vector<300x128xbf16>, vector<2x128xf32> -> vector<2x128xf32>
    %c0_14 = arith.constant 0 : index
    %c0_15 = arith.constant 0 : index
    %35 = vector.load %arg7[%c0_14, %c0_15] : memref<1x128xf32, #tpu.memory_space<vmem>>, vector<1x128xf32>
    %36 = vector.broadcast %35 : vector<1x128xf32> to vector<2x128xf32>
    %37 = arith.addf %34, %36 : vector<2x128xf32>
    %38 = math.tanh %37 : vector<2x128xf32>
    %c0_16 = arith.constant 0 : index
    %c0_17 = arith.constant 0 : index
    %39 = vector.load %arg8[%c0_16, %c0_17] : memref<2x128xf32, #tpu.memory_space<vmem>>, vector<2x128xf32>
    tpu.vector_store %arg8[%c0_16, %c0_17], %38 {strides = array<i32>} : memref<2x128xf32, #tpu.memory_space<vmem>>, vector<2x128xf32>,
    return
  }
  func.func @transform_0(%arg0: i32) -> (i32, i32) {
    %c0_i32 = arith.constant 0 : i32
    %c0_i32_0 = arith.constant 0 : i32
    return %arg0, %c0_i32 : i32, i32
  }
  func.func @transform_1(%arg0: i32) -> (i32, i32) {
    %c0_i32 = arith.constant 0 : i32
    %c0_i32_0 = arith.constant 0 : i32
    %c0_i32_1 = arith.constant 0 : i32
    return %c0_i32, %c0_i32_0 : i32, i32
  }
  func.func @transform_2(%arg0: i32) -> (i32, i32) {
    %c0_i32 = arith.constant 0 : i32
    %c0_i32_0 = arith.constant 0 : i32
    %c0_i32_1 = arith.constant 0 : i32
    return %c0_i32, %c0_i32_0 : i32, i32
  }
  func.func @transform_3(%arg0: i32) -> (i32, i32) {
    %c0_i32 = arith.constant 0 : i32
    %c0_i32_0 = arith.constant 0 : i32
    %c0_i32_1 = arith.constant 0 : i32
    return %c0_i32, %c0_i32_0 : i32, i32
  }
  func.func @transform_4(%arg0: i32) -> (i32, i32) {
    %c0_i32 = arith.constant 0 : i32
    %c0_i32_0 = arith.constant 0 : i32
    %c0_i32_1 = arith.constant 0 : i32
    return %c0_i32, %c0_i32_0 : i32, i32
  }
  func.func @transform_5(%arg0: i32) -> (i32, i32) {
    %c0_i32 = arith.constant 0 : i32
    %c0_i32_0 = arith.constant 0 : i32
    %c0_i32_1 = arith.constant 0 : i32
    return %c0_i32, %c0_i32_0 : i32, i32
  }
  func.func @transform_6(%arg0: i32) -> (i32, i32) {
    %c0_i32 = arith.constant 0 : i32
    %c0_i32_0 = arith.constant 0 : i32
    %c0_i32_1 = arith.constant 0 : i32
    return %c0_i32, %c0_i32_0 : i32, i32
  }
  func.func @transform_7(%arg0: i32) -> (i32, i32) {
    %c0_i32 = arith.constant 0 : i32
    %c0_i32_0 = arith.constant 0 : i32
    return %arg0, %c0_i32 : i32, i32
  }
}

module attributes {stable_mosaic.version = 11 : i64} {
  func.func @actor_kernel(%arg0: i32, %arg1: memref<2x3xf32, #tpu.memory_space<vmem>>, %arg2: memref<3x400xf32, #tpu.memory_space<vmem>>, %arg3: memref<1x400xf32, #tpu.memory_space<vmem>>, %arg4: memref<400x300xbf16, #tpu.memory_space<vmem>>, %arg5: memref<1x300xf32, #tpu.memory_space<vmem>>, %arg6: memref<300x128xbf16, #tpu.memory_space<vmem>>, %arg7: memref<1x128xf32, #tpu.memory_space<vmem>>, %arg8: memref<2x128xf32, #tpu.memory_space<vmem>>) attributes {dimension_semantics = [#tpu.dimension_semantics<parallel>], iteration_bounds = array<i64: 1>, scalar_prefetch = 0 : i64, scratch_operands = 0 : i64, tpu.core_type = #tpu.core_type<tc>, window_params = [{transform_indices = @transform_0, window_bounds = array<i64: 2, 3>}, {pipeline_mode = #tpu.pipeline_mode<synchronous>, transform_indices = @transform_1, window_bounds = array<i64: 3, 400>}, {pipeline_mode = #tpu.pipeline_mode<synchronous>, transform_indices = @transform_2, window_bounds = array<i64: 1, 400>}, {pipeline_mode = #tpu.pipeline_mode<synchronous>, transform_indices = @transform_3, window_bounds = array<i64: 400, 300>}, {pipeline_mode = #tpu.pipeline_mode<synchronous>, transform_indices = @transform_4, window_bounds = array<i64: 1, 300>}, {pipeline_mode = #tpu.pipeline_mode<synchronous>, transform_indices = @transform_5, window_bounds = array<i64: 300, 128>}, {pipeline_mode = #tpu.pipeline_mode<synchronous>, transform_indices = @transform_6, window_bounds = array<i64: 1, 128>}, {transform_indices = @transform_7, window_bounds = array<i64: 2, 128>}]} {
    %c0 = arith.constant 0 : index
    %c0_0 = arith.constant 0 : index
    %0 = vector.load %arg1[%c0, %c0_0] : memref<2x3xf32, #tpu.memory_space<vmem>>, vector<2x3xf32>
    %c0_1 = arith.constant 0 : index
    %c0_2 = arith.constant 0 : index
    %1 = vector.load %arg2[%c0_1, %c0_2] : memref<3x400xf32, #tpu.memory_space<vmem>>, vector<3x400xf32>
    %c0_3 = arith.constant 0 : index
    %c0_4 = arith.constant 0 : index
    %2 = vector.load %arg3[%c0_3, %c0_4] : memref<1x400xf32, #tpu.memory_space<vmem>>, vector<1x400xf32>
    %3 = vector.extract_strided_slice %0 {offsets = [0, 0], sizes = [2, 1], strides = [1, 1]} : vector<2x3xf32> to vector<2x1xf32>
    %4 = vector.extract_strided_slice %1 {offsets = [0, 0], sizes = [1, 400], strides = [1, 1]} : vector<3x400xf32> to vector<1x400xf32>
    %5 = vector.broadcast %3 : vector<2x1xf32> to vector<2x400xf32>
    %6 = vector.broadcast %4 : vector<1x400xf32> to vector<2x400xf32>
    %7 = arith.mulf %5, %6 : vector<2x400xf32>
    %8 = vector.broadcast %2 : vector<1x400xf32> to vector<2x400xf32>
    %9 = arith.addf %8, %7 : vector<2x400xf32>
    %10 = vector.extract_strided_slice %0 {offsets = [0, 1], sizes = [2, 1], strides = [1, 1]} : vector<2x3xf32> to vector<2x1xf32>
    %11 = vector.extract_strided_slice %1 {offsets = [1, 0], sizes = [1, 400], strides = [1, 1]} : vector<3x400xf32> to vector<1x400xf32>
    %12 = vector.broadcast %10 : vector<2x1xf32> to vector<2x400xf32>
    %13 = vector.broadcast %11 : vector<1x400xf32> to vector<2x400xf32>
    %14 = arith.mulf %12, %13 : vector<2x400xf32>
    %15 = arith.addf %9, %14 : vector<2x400xf32>
    %16 = vector.extract_strided_slice %0 {offsets = [0, 2], sizes = [2, 1], strides = [1, 1]} : vector<2x3xf32> to vector<2x1xf32>
    %17 = vector.extract_strided_slice %1 {offsets = [2, 0], sizes = [1, 400], strides = [1, 1]} : vector<3x400xf32> to vector<1x400xf32>
    %18 = vector.broadcast %16 : vector<2x1xf32> to vector<2x400xf32>
    %19 = vector.broadcast %17 : vector<1x400xf32> to vector<2x400xf32>
    %20 = arith.mulf %18, %19 : vector<2x400xf32>
    %21 = arith.addf %15, %20 : vector<2x400xf32>
    %cst = arith.constant 0.000000e+00 : f32
    %22 = vector.broadcast %cst : f32 to vector<2x400xf32>
    %23 = arith.maximumf %21, %22 : vector<2x400xf32>
    %24 = arith.truncf %23 : vector<2x400xf32> to vector<2x400xbf16>
    %c0_5 = arith.constant 0 : index
    %c0_6 = arith.constant 0 : index
    %25 = vector.load %arg4[%c0_5, %c0_6] : memref<400x300xbf16, #tpu.memory_space<vmem>>, vector<400x300xbf16>
    %cst_7 = arith.constant dense<0.000000e+00> : vector<2x300xf32>
    %26 = tpu.matmul %24, %25, %cst_7 {dimension_numbers = #tpu.dot_dimension_numbers<[1], [0], [0], [1], [0, 0, 1, 1], [], []>} : vector<2x400xbf16>, vector<400x300xbf16>, vector<2x300xf32> -> vector<2x300xf32>
    %c0_8 = arith.constant 0 : index
    %c0_9 = arith.constant 0 : index
    %27 = vector.load %arg5[%c0_8, %c0_9] : memref<1x300xf32, #tpu.memory_space<vmem>>, vector<1x300xf32>
    %28 = vector.broadcast %27 : vector<1x300xf32> to vector<2x300xf32>
    %29 = arith.addf %26, %28 : vector<2x300xf32>
    %cst_10 = arith.constant 0.000000e+00 : f32
    %30 = vector.broadcast %cst_10 : f32 to vector<2x300xf32>
    %31 = arith.maximumf %29, %30 : vector<2x300xf32>
    %32 = arith.truncf %31 : vector<2x300xf32> to vector<2x300xbf16>
    %c0_11 = arith.constant 0 : index
    %c0_12 = arith.constant 0 : index
    %33 = vector.load %arg6[%c0_11, %c0_12] : memref<300x128xbf16, #tpu.memory_space<vmem>>, vector<300x128xbf16>
    %cst_13 = arith.constant dense<0.000000e+00> : vector<2x128xf32>
    %34 = tpu.matmul %32, %33, %cst_13 {dimension_numbers = #tpu.dot_dimension_numbers<[1], [0], [0], [1], [0, 0, 1, 1], [], []>} : vector<2x300xbf16>, vector<300x128xbf16>, vector<2x128xf32> -> vector<2x128xf32>
    %c0_14 = arith.constant 0 : index
    %c0_15 = arith.constant 0 : index
    %35 = vector.load %arg7[%c0_14, %c0_15] : memref<1x128xf32, #tpu.memory_space<vmem>>, vector<1x128xf32>
    %36 = vector.broadcast %35 : vector<1x128xf32> to vector<2x128xf32>
    %37 = arith.addf %34, %36 : vector<2x128xf32>
    %38 = math.tanh %37 : vector<2x128xf32>
    %c0_16 = arith.constant 0 : index
    %c0_17 = arith.constant 0 : index
    %39 = vector.load %arg8[%c0_16, %c0_17] : memref<2x128xf32, #tpu.memory_space<vmem>>, vector<2x128xf32>
    tpu.vector_store %arg8[%c0_16, %c0_17], %38 {strides = array<i32>} : memref<2x128xf32, #tpu.memory_space<vmem>>, vector<2x128xf32>,
    return
  }
  func.func @transform_0(%arg0: i32) -> (i32, i32) {
    %c0_i32 = arith.constant 0 : i32
    %c0_i32_0 = arith.constant 0 : i32
    return %arg0, %c0_i32 : i32, i32
  }
  func.func @transform_1(%arg0: i32) -> (i32, i32) {
    %c0_i32 = arith.constant 0 : i32
    %c0_i32_0 = arith.constant 0 : i32
    %c0_i32_1 = arith.constant 0 : i32
    return %c0_i32, %c0_i32_0 : i32, i32
  }
  func.func @transform_2(%arg0: i32) -> (i32, i32) {
    %c0_i32 = arith.constant 0 : i32
    %c0_i32_0 = arith.constant 0 : i32
    %c0_i32_1 = arith.constant 0 : i32
    return %c0_i32, %c0_i32_0 : i32, i32
  }
  func.func @transform_3(%arg0: i32) -> (i32, i32) {
    %c0_i32 = arith.constant 0 : i32
    %c0_i32_0 = arith.constant 0 : i32
    %c0_i32_1 = arith.constant 0 : i32
    return %c0_i32, %c0_i32_0 : i32, i32
  }
  func.func @transform_4(%arg0: i32) -> (i32, i32) {
    %c0_i32 = arith.constant 0 : i32
    %c0_i32_0 = arith.constant 0 : i32
    %c0_i32_1 = arith.constant 0 : i32
    return %c0_i32, %c0_i32_0 : i32, i32
  }
  func.func @transform_5(%arg0: i32) -> (i32, i32) {
    %c0_i32 = arith.constant 0 : i32
    %c0_i32_0 = arith.constant 0 : i32
    %c0_i32_1 = arith.constant 0 : i32
    return %c0_i32, %c0_i32_0 : i32, i32
  }
  func.func @transform_6(%arg0: i32) -> (i32, i32) {
    %c0_i32 = arith.constant 0 : i32
    %c0_i32_0 = arith.constant 0 : i32
    %c0_i32_1 = arith.constant 0 : i32
    return %c0_i32, %c0_i32_0 : i32, i32
  }
  func.func @transform_7(%arg0: i32) -> (i32, i32) {
    %c0_i32 = arith.constant 0 : i32
    %c0_i32_0 = arith.constant 0 : i32
    return %arg0, %c0_i32 : i32, i32
  }
}

</mosaic_0001>

<llo_original>
// kernel: _actor_forward.1
$region0: #{_actor_forward.1}
  #allocation0 [shape = 'u32[]', space=smem, size = 0x4, offset = 0x4, fixed_abs, tag = 'smem constant byte address 0x4 - core index']
  #allocation1 [shape = 'u32[144,128]{1,0:T(1,128)}', space=vmem, size = 0x12000, scoped, tag = 'internal scratch']
  %s0 = inlined_call_operand.hbm [shape: f32[2,3], index: 0, kind: input, shape index: {}]
  %s1 = inlined_call_operand.hbm [shape: f32[3,400], index: 1, kind: input, shape index: {}]
  %s2 = inlined_call_operand.vmem [shape: f32[1,400], index: 2, kind: input, shape index: {}]
  %s3 = inlined_call_operand.hbm [shape: bf16[400,300], index: 3, kind: input, shape index: {}]
  %s4 = inlined_call_operand.vmem [shape: f32[1,300], index: 4, kind: input, shape index: {}]
  %s5 = inlined_call_operand.hbm [shape: bf16[300,128], index: 5, kind: input, shape index: {}]
  %s6 = inlined_call_operand.vmem [shape: f32[1,128], index: 6, kind: input, shape index: {}]
  %s7 = inlined_call_operand.vmem [shape: f32[2,128], index: 7, kind: output, shape index: {}]
  %s8 = sld [smem:[#allocation0]]
  $region54: #{_actor_forward.1} parent=0
    _
  %s10 = ssub.s32 1, %s8
  %s11 = scalar_select 0, %s10, %s8
  $region1: #{_actor_forward.1} parent=0
    #allocation2 [shape = 'u8[1024]{0}', space=vmem, size = 0x400, scoped, tag = 'input window, operand 0, single buffered']
    #allocation3 [shape = 's32[1]{0}', space=sflag, size = 0x4, scoped, tag = 'scoped memory for _actor_forward.1']
    #allocation4 [shape = 'u8[8192]{0}', space=vmem, size = 0x2000, scoped, tag = 'input window, operand 1, single buffered']
    #allocation5 [shape = 's32[1]{0}', space=sflag, size = 0x4, scoped, tag = 'scoped memory for _actor_forward.1']
    #allocation6 [shape = 'u8[307200]{0}', space=vmem, size = 0x4b000, scoped, tag = 'input window, operand 3, single buffered']
    #allocation7 [shape = 'u8[77824]{0}', space=vmem, size = 0x13000, scoped, tag = 'input window, operand 5, single buffered']
    #allocation8 [shape = 's32[1]{0}', space=sflag, size = 0x4, scoped, tag = 'scoped memory for _actor_forward.1']
    %12 = vsyncpa [#allocation3], 0
    %13 = vsyncpa [#allocation5], 0
    %14 = vsyncpa [#allocation8], 0
    // Predicated region
    $region2: #{_actor_forward.1} parent=1 // pred_check
      _
    $region3: #{_actor_forward.1} parent=1 // pred_check_branch
      %16 = sbr.rel (0) target = $region5
    $region4: #{_actor_forward.1} parent=1 // pred_region
      %s18 = ssub.s32 32, 32
      %19 = vsyncadd [#allocation3], %s18
      %s21 = sshll.u32 [#allocation2], 4
      %s22 = int_to_ptr.vmem [resolvable:$true] %s21
      %24 = dma.hbm_to_vmem [thread:$0]  %s0, 32, %s22, [#allocation3]
    $region5: #{_actor_forward.1} parent=1 // pred_fallthru
      _
    // Predicated region
    $region6: #{_actor_forward.1} parent=1 // pred_check
      _
    $region7: #{_actor_forward.1} parent=1 // pred_check_branch
      %26 = sbr.rel (0) target = $region9
    $region8: #{_actor_forward.1} parent=1 // pred_region
      %s28 = ssub.s32 256, 256
      %29 = vsyncadd [#allocation5], %s28
      %s31 = sshll.u32 [#allocation4], 4
      %s32 = int_to_ptr.vmem [resolvable:$true] %s31
      %34 = dma.hbm_to_vmem [thread:$0]  %s1, 256, %s32, [#allocation5]
    $region9: #{_actor_forward.1} parent=1 // pred_fallthru
      _
    // Predicated region
    $region10: #{_actor_forward.1} parent=1 // pred_check
      _
    $region11: #{_actor_forward.1} parent=1 // pred_check_branch
      %36 = sbr.rel (0) target = $region13
    $region12: #{_actor_forward.1} parent=1 // pred_region
      _
    $region13: #{_actor_forward.1} parent=1 // pred_fallthru
      _
    // Predicated region
    $region14: #{_actor_forward.1} parent=1 // pred_check
      _
    $region15: #{_actor_forward.1} parent=1 // pred_check_branch
      %38 = sbr.rel (0) target = $region17
    $region16: #{_actor_forward.1} parent=1 // pred_region
      %s40 = ssub.s32 9600, 9600
      %41 = vsyncadd [#allocation5], %s40
      %s42 = sshll.u32 [#allocation6], 4
      %s43 = int_to_ptr.vmem [resolvable:$true] %s42
      %48 = dma.hbm_to_vmem [thread:$0]  %s3, 9600, %s43, [#allocation5], 192, 192, 12
    $region17: #{_actor_forward.1} parent=1 // pred_fallthru
      _
    // Predicated region
    $region18: #{_actor_forward.1} parent=1 // pred_check
      _
    $region19: #{_actor_forward.1} parent=1 // pred_check_branch
      %50 = sbr.rel (0) target = $region21
    $region20: #{_actor_forward.1} parent=1 // pred_region
      _
    $region21: #{_actor_forward.1} parent=1 // pred_fallthru
      _
    // Predicated region
    $region22: #{_actor_forward.1} parent=1 // pred_check
      _
    $region23: #{_actor_forward.1} parent=1 // pred_check_branch
      %52 = sbr.rel (0) target = $region25
    $region24: #{_actor_forward.1} parent=1 // pred_region
      %s54 = ssub.s32 2432, 2432
      %55 = vsyncadd [#allocation8], %s54
      %s56 = sshll.u32 [#allocation7], 4
      %s57 = int_to_ptr.vmem [resolvable:$true] %s56
      %62 = dma.hbm_to_vmem [thread:$0]  %s5, 2432, %s57, [#allocation8], 64, 64, 4
    $region25: #{_actor_forward.1} parent=1 // pred_fallthru
      _
    // Predicated region
    $region26: #{_actor_forward.1} parent=1 // pred_check
      _
    $region27: #{_actor_forward.1} parent=1 // pred_check_branch
      %64 = sbr.rel (0) target = $region29
    $region28: #{_actor_forward.1} parent=1 // pred_region
      _
    $region29: #{_actor_forward.1} parent=1 // pred_fallthru
      _
    // Predicated region
    $region30: #{_actor_forward.1} parent=1 // pred_check
      _
    $region31: #{_actor_forward.1} parent=1 // pred_check_branch
      %66 = sbr.rel (0) target = $region33
    $region32: #{_actor_forward.1} parent=1 // pred_region
      %67 = dma.done [#allocation3], 32
    $region33: #{_actor_forward.1} parent=1 // pred_fallthru
      _
    // Predicated region
    $region34: #{_actor_forward.1} parent=1 // pred_check
      _
    $region35: #{_actor_forward.1} parent=1 // pred_check_branch
      %69 = sbr.rel (0) target = $region37
    $region36: #{_actor_forward.1} parent=1 // pred_region
      %70 = dma.done [#allocation5], 256
    $region37: #{_actor_forward.1} parent=1 // pred_fallthru
      _
    // Predicated region
    $region38: #{_actor_forward.1} parent=1 // pred_check
      _
    $region39: #{_actor_forward.1} parent=1 // pred_check_branch
      %72 = sbr.rel (0) target = $region41
    $region40: #{_actor_forward.1} parent=1 // pred_region
      %73 = dma.done [#allocation5], 9600
    $region41: #{_actor_forward.1} parent=1 // pred_fallthru
      _
    // Predicated region
    $region42: #{_actor_forward.1} parent=1 // pred_check
      _
    $region43: #{_actor_forward.1} parent=1 // pred_check_branch
      %75 = sbr.rel (0) target = $region45
    $region44: #{_actor_forward.1} parent=1 // pred_region
      %76 = dma.done [#allocation8], 2432
    $region45: #{_actor_forward.1} parent=1 // pred_fallthru
      _
    %v78 = vld [vmem:[#allocation2] sm:$0x3]
    %v79 = vld [vmem:[#allocation4] sm:$0x77]
    %v80 = vld [vmem:[#allocation4 + $0x8] sm:$0x77]
    %v81 = vld [vmem:[%s2] sm:$0xf]
    %83 = vset.pattern.permute.xlu0 0
    %84 = vperm.xlu0 %83, %v78
    %v85 = vpop.permute.xlu0 %84
    %v89 = vlaneseq
    %v90 = vshrl.u32 %v89, 7
    %v91 = vsub.s32 0, %v90
    %v92 = vrot.slane %v79, %v91
    %v93 = vlaneseq
    %v94 = vshrl.u32 %v93, 7
    %v95 = vsub.s32 4, %v94
    %v96 = vrot.slane %v79, %v95
    %v97 = vlaneseq
    %v98 = vshrl.u32 %v97, 7
    %v99 = vsub.s32 0, %v98
    %v100 = vrot.slane %v80, %v99
    %v101 = vlaneseq
    %v102 = vshrl.u32 %v101, 7
    %v103 = vsub.s32 4, %v102
    %v104 = vrot.slane %v80, %v103
    %v109 = vlaneseq
    %v110 = vshrl.u32 %v109, 7
    %v111 = vsub.s32 0, %v110
    %v112 = vrot.slane %v92, %v111
    %v113 = vlaneseq
    %v114 = vshrl.u32 %v113, 7
    %v115 = vsub.s32 0, %v114
    %v116 = vrot.slane %v96, %v115
    %v117 = vlaneseq
    %v118 = vshrl.u32 %v117, 7
    %v119 = vsub.s32 0, %v118
    %v120 = vrot.slane %v100, %v119
    %v121 = vlaneseq
    %v122 = vshrl.u32 %v121, 7
    %v123 = vsub.s32 0, %v122
    %v124 = vrot.slane %v104, %v123
    %v125 = vmul.f32 %v85, %v112
    %v126 = vmul.f32 %v85, %v116
    %v127 = vmul.f32 %v85, %v120
    %v128 = vmul.f32 %v85, %v124
    %v130 = vlaneseq
    %v131 = vshrl.u32 %v130, 7
    %v132 = vsub.s32 0, %v131
    %v133 = vrot.slane %v81, %v132
    %v134 = vlaneseq
    %v135 = vshrl.u32 %v134, 7
    %v136 = vsub.s32 1, %v135
    %v137 = vrot.slane %v81, %v136
    %v138 = vlaneseq
    %v139 = vshrl.u32 %v138, 7
    %v140 = vsub.s32 2, %v139
    %v141 = vrot.slane %v81, %v140
    %v142 = vlaneseq
    %v143 = vshrl.u32 %v142, 7
    %v144 = vsub.s32 3, %v143
    %v145 = vrot.slane %v81, %v144
    %v150 = vadd.f32 %v133, %v125
    %v151 = vadd.f32 %v137, %v126
    %v152 = vadd.f32 %v141, %v127
    %v153 = vadd.f32 %v145, %v128
    %154 = vset.pattern.permute.xlu0 1
    %155 = vperm.xlu0 %154, %v78
    %v156 = vpop.permute.xlu0 %155
    %v158 = vlaneseq
    %v159 = vshrl.u32 %v158, 7
    %v160 = vsub.s32 1, %v159
    %v161 = vrot.slane %v79, %v160
    %v162 = vlaneseq
    %v163 = vshrl.u32 %v162, 7
    %v164 = vsub.s32 5, %v163
    %v165 = vrot.slane %v79, %v164
    %v166 = vlaneseq
    %v167 = vshrl.u32 %v166, 7
    %v168 = vsub.s32 1, %v167
    %v169 = vrot.slane %v80, %v168
    %v170 = vlaneseq
    %v171 = vshrl.u32 %v170, 7
    %v172 = vsub.s32 5, %v171
    %v173 = vrot.slane %v80, %v172
    %v178 = vlaneseq
    %v179 = vshrl.u32 %v178, 7
    %v180 = vsub.s32 1, %v179
    %v181 = vrot.slane %v161, %v180
    %v182 = vlaneseq
    %v183 = vshrl.u32 %v182, 7
    %v184 = vsub.s32 1, %v183
    %v185 = vrot.slane %v165, %v184
    %v186 = vlaneseq
    %v187 = vshrl.u32 %v186, 7
    %v188 = vsub.s32 1, %v187
    %v189 = vrot.slane %v169, %v188
    %v190 = vlaneseq
    %v191 = vshrl.u32 %v190, 7
    %v192 = vsub.s32 1, %v191
    %v193 = vrot.slane %v173, %v192
    %v194 = vmul.f32 %v156, %v181
    %v195 = vmul.f32 %v156, %v185
    %v196 = vmul.f32 %v156, %v189
    %v197 = vmul.f32 %v156, %v193
    %v198 = vadd.f32 %v150, %v194
    %v199 = vadd.f32 %v151, %v195
    %v200 = vadd.f32 %v152, %v196
    %v201 = vadd.f32 %v153, %v197
    %202 = vset.pattern.permute.xlu0 2
    %203 = vperm.xlu0 %202, %v78
    %v204 = vpop.permute.xlu0 %203
    %v206 = vlaneseq
    %v207 = vshrl.u32 %v206, 7
    %v208 = vsub.s32 2, %v207
    %v209 = vrot.slane %v79, %v208
    %v210 = vlaneseq
    %v211 = vshrl.u32 %v210, 7
    %v212 = vsub.s32 6, %v211
    %v213 = vrot.slane %v79, %v212
    %v214 = vlaneseq
    %v215 = vshrl.u32 %v214, 7
    %v216 = vsub.s32 2, %v215
    %v217 = vrot.slane %v80, %v216
    %v218 = vlaneseq
    %v219 = vshrl.u32 %v218, 7
    %v220 = vsub.s32 6, %v219
    %v221 = vrot.slane %v80, %v220
    %v226 = vlaneseq
    %v227 = vshrl.u32 %v226, 7
    %v228 = vsub.s32 2, %v227
    %v229 = vrot.slane %v209, %v228
    %v230 = vlaneseq
    %v231 = vshrl.u32 %v230, 7
    %v232 = vsub.s32 2, %v231
    %v233 = vrot.slane %v213, %v232
    %v234 = vlaneseq
    %v235 = vshrl.u32 %v234, 7
    %v236 = vsub.s32 2, %v235
    %v237 = vrot.slane %v217, %v236
    %v238 = vlaneseq
    %v239 = vshrl.u32 %v238, 7
    %v240 = vsub.s32 2, %v239
    %v241 = vrot.slane %v221, %v240
    %v242 = vmul.f32 %v204, %v229
    %v243 = vmul.f32 %v204, %v233
    %v244 = vmul.f32 %v204, %v237
    %v245 = vmul.f32 %v204, %v241
    %v246 = vadd.f32 %v198, %v242
    %v247 = vadd.f32 %v199, %v243
    %v248 = vadd.f32 %v200, %v244
    %v249 = vadd.f32 %v201, %v245
    %v250 = vmax.f32 %v246, 0.0
    %v251 = vmax.f32 %v247, 0.0
    %v252 = vmax.f32 %v248, 0.0
    %v253 = vmax.f32 %v249, 0.0
    %v254 = vpack.c.bf16 %v250, %v250
    %v255 = vpack.c.bf16 %v251, %v251
    %v256 = vpack.c.bf16 %v252, %v252
    %v257 = vpack.c.bf16 %v253, %v253
    %v258 = vld [vmem:[#allocation6] sm:$0xff]
    %v259 = vld [vmem:[#allocation6 + $0x8] sm:$0xf]
    %v260 = vld [vmem:[#allocation6 + $0xc] sm:$0xff]
    %v261 = vld [vmem:[#allocation6 + $0x14] sm:$0xf]
    %v262 = vld [vmem:[#allocation6 + $0x18] sm:$0xff]
    %v263 = vld [vmem:[#allocation6 + $0x20] sm:$0xf]
    %v264 = vld [vmem:[#allocation6 + $0x24] sm:$0xff]
    %v265 = vld [vmem:[#allocation6 + $0x2c] sm:$0xf]
    %v266 = vld [vmem:[#allocation6 + $0x30] sm:$0xff]
    %v267 = vld [vmem:[#allocation6 + $0x38] sm:$0xf]
    %v268 = vld [vmem:[#allocation6 + $0x3c] sm:$0xff]
    %v269 = vld [vmem:[#allocation6 + $0x44] sm:$0xf]
    %v270 = vld [vmem:[#allocation6 + $0x48] sm:$0xff]
    %v271 = vld [vmem:[#allocation6 + $0x50] sm:$0xf]
    %v272 = vld [vmem:[#allocation6 + $0x54] sm:$0xff]
    %v273 = vld [vmem:[#allocation6 + $0x5c] sm:$0xf]
    %v274 = vld [vmem:[#allocation6 + $0x60] sm:$0xff]
    %v275 = vld [vmem:[#allocation6 + $0x68] sm:$0xf]
    %v276 = vld [vmem:[#allocation6 + $0x6c] sm:$0xff]
    %v277 = vld [vmem:[#allocation6 + $0x74] sm:$0xf]
    %v278 = vld [vmem:[#allocation6 + $0x78] sm:$0xff]
    %v279 = vld [vmem:[#allocation6 + $0x80] sm:$0xf]
    %v280 = vld [vmem:[#allocation6 + $0x84] sm:$0xff]
    %v281 = vld [vmem:[#allocation6 + $0x8c] sm:$0xf]
    %v282 = vld [vmem:[#allocation6 + $0x90] sm:$0xff]
    %v283 = vld [vmem:[#allocation6 + $0x98] sm:$0xf]
    %v284 = vld [vmem:[#allocation6 + $0x9c] sm:$0xff]
    %v285 = vld [vmem:[#allocation6 + $0xa4] sm:$0xf]
    %v286 = vld [vmem:[#allocation6 + $0xa8] sm:$0xff]
    %v287 = vld [vmem:[#allocation6 + $0xb0] sm:$0xf]
    %v288 = vld [vmem:[#allocation6 + $0xb4] sm:$0xff]
    %v289 = vld [vmem:[#allocation6 + $0xbc] sm:$0xf]
    %v290 = vld [vmem:[#allocation6 + $0xc0] sm:$0xff]
    %v291 = vld [vmem:[#allocation6 + $0xc8] sm:$0xf]
    %v292 = vld [vmem:[#allocation6 + $0xcc] sm:$0xff]
    %v293 = vld [vmem:[#allocation6 + $0xd4] sm:$0xf]
    %v294 = vld [vmem:[#allocation6 + $0xd8] sm:$0xff]
    %v295 = vld [vmem:[#allocation6 + $0xe0] sm:$0xf]
    %v296 = vld [vmem:[#allocation6 + $0xe4] sm:$0xff]
    %v297 = vld [vmem:[#allocation6 + $0xec] sm:$0xf]
    %v298 = vld [vmem:[#allocation6 + $0xf0] sm:$0xff]
    %v299 = vld [vmem:[#allocation6 + $0xf8] sm:$0xf]
    %v300 = vld [vmem:[#allocation6 + $0xfc] sm:$0xff]
    %v301 = vld [vmem:[#allocation6 + $0x104] sm:$0xf]
    %v302 = vld [vmem:[#allocation6 + $0x108] sm:$0xff]
    %v303 = vld [vmem:[#allocation6 + $0x110] sm:$0xf]
    %v304 = vld [vmem:[#allocation6 + $0x114] sm:$0xff]
    %v305 = vld [vmem:[#allocation6 + $0x11c] sm:$0xf]
    %v306 = vld [vmem:[#allocation6 + $0x120] sm:$0xff]
    %v307 = vld [vmem:[#allocation6 + $0x128] sm:$0xf]
    %v308 = vld [vmem:[#allocation6 + $0x12c] sm:$0xff]
    %v309 = vld [vmem:[#allocation6 + $0x134] sm:$0xf]
    %v310 = vld [vmem:[#allocation6 + $0x138] sm:$0xff]
    %v311 = vld [vmem:[#allocation6 + $0x140] sm:$0xf]
    %v312 = vld [vmem:[#allocation6 + $0x144] sm:$0xff]
    %v313 = vld [vmem:[#allocation6 + $0x14c] sm:$0xf]
    %v314 = vld [vmem:[#allocation6 + $0x150] sm:$0xff]
    %v315 = vld [vmem:[#allocation6 + $0x158] sm:$0xf]
    %v316 = vld [vmem:[#allocation6 + $0x15c] sm:$0xff]
    %v317 = vld [vmem:[#allocation6 + $0x164] sm:$0xf]
    %v318 = vld [vmem:[#allocation6 + $0x168] sm:$0xff]
    %v319 = vld [vmem:[#allocation6 + $0x170] sm:$0xf]
    %v320 = vld [vmem:[#allocation6 + $0x174] sm:$0xff]
    %v321 = vld [vmem:[#allocation6 + $0x17c] sm:$0xf]
    %v322 = vld [vmem:[#allocation6 + $0x180] sm:$0xff]
    %v323 = vld [vmem:[#allocation6 + $0x188] sm:$0xf]
    %v324 = vld [vmem:[#allocation6 + $0x18c] sm:$0xff]
    %v325 = vld [vmem:[#allocation6 + $0x194] sm:$0xf]
    %v326 = vld [vmem:[#allocation6 + $0x198] sm:$0xff]
    %v327 = vld [vmem:[#allocation6 + $0x1a0] sm:$0xf]
    %v328 = vld [vmem:[#allocation6 + $0x1a4] sm:$0xff]
    %v329 = vld [vmem:[#allocation6 + $0x1ac] sm:$0xf]
    %v330 = vld [vmem:[#allocation6 + $0x1b0] sm:$0xff]
    %v331 = vld [vmem:[#allocation6 + $0x1b8] sm:$0xf]
    %v332 = vld [vmem:[#allocation6 + $0x1bc] sm:$0xff]
    %v333 = vld [vmem:[#allocation6 + $0x1c4] sm:$0xf]
    %v334 = vld [vmem:[#allocation6 + $0x1c8] sm:$0xff]
    %v335 = vld [vmem:[#allocation6 + $0x1d0] sm:$0xf]
    %v336 = vld [vmem:[#allocation6 + $0x1d4] sm:$0xff]
    %v337 = vld [vmem:[#allocation6 + $0x1dc] sm:$0xf]
    %v338 = vld [vmem:[#allocation6 + $0x1e0] sm:$0xff]
    %v339 = vld [vmem:[#allocation6 + $0x1e8] sm:$0xf]
    %v340 = vld [vmem:[#allocation6 + $0x1ec] sm:$0xff]
    %v341 = vld [vmem:[#allocation6 + $0x1f4] sm:$0xf]
    %v342 = vld [vmem:[#allocation6 + $0x1f8] sm:$0xff]
    %v343 = vld [vmem:[#allocation6 + $0x200] sm:$0xf]
    %v344 = vld [vmem:[#allocation6 + $0x204] sm:$0xff]
    %v345 = vld [vmem:[#allocation6 + $0x20c] sm:$0xf]
    %v346 = vld [vmem:[#allocation6 + $0x210] sm:$0xff]
    %v347 = vld [vmem:[#allocation6 + $0x218] sm:$0xf]
    %v348 = vld [vmem:[#allocation6 + $0x21c] sm:$0xff]
    %v349 = vld [vmem:[#allocation6 + $0x224] sm:$0xf]
    %v350 = vld [vmem:[#allocation6 + $0x228] sm:$0xff]
    %v351 = vld [vmem:[#allocation6 + $0x230] sm:$0xf]
    %v352 = vld [vmem:[#allocation6 + $0x234] sm:$0xff]
    %v353 = vld [vmem:[#allocation6 + $0x23c] sm:$0xf]
    %v354 = vld [vmem:[#allocation6 + $0x240] sm:$0xff]
    %v355 = vld [vmem:[#allocation6 + $0x248] sm:$0xf]
    %v356 = vld [vmem:[#allocation6 + $0x24c] sm:$0xff]
    %v357 = vld [vmem:[#allocation6 + $0x254] sm:$0xf]
    %v358 = vld [vmem:[%s4] sm:$0x7]
    %v360 = vlaneseq
    %v361 = vshrl.u32 %v360, 7
    %v362 = vsub.s32 0, %v361
    %v363 = vrot.slane %v358, %v362
    %v364 = vlaneseq
    %v365 = vshrl.u32 %v364, 7
    %v366 = vsub.s32 1, %v365
    %v367 = vrot.slane %v358, %v366
    %v368 = vlaneseq
    %v369 = vshrl.u32 %v368, 7
    %v370 = vsub.s32 2, %v369
    %v371 = vrot.slane %v358, %v370
    %v475 = vunpack.c.l.b16 %v258
    %v476 = vunpack.c.h.b16 %v258
    %v477 = vunpack.c.l.b16 %v259
    %v478 = vunpack.c.l.b16 %v260
    %v479 = vunpack.c.h.b16 %v260
    %v480 = vunpack.c.l.b16 %v261
    %v481 = vunpack.c.l.b16 %v262
    %v482 = vunpack.c.h.b16 %v262
    %v483 = vunpack.c.l.b16 %v263
    %v484 = vunpack.c.l.b16 %v264
    %v485 = vunpack.c.h.b16 %v264
    %v486 = vunpack.c.l.b16 %v265
    %v487 = vunpack.c.l.b16 %v266
    %v488 = vunpack.c.h.b16 %v266
    %v489 = vunpack.c.l.b16 %v267
    %v490 = vunpack.c.l.b16 %v268
    %v491 = vunpack.c.h.b16 %v268
    %v492 = vunpack.c.l.b16 %v269
    %v493 = vunpack.c.l.b16 %v270
    %v494 = vunpack.c.h.b16 %v270
    %v495 = vunpack.c.l.b16 %v271
    %v496 = vunpack.c.l.b16 %v272
    %v497 = vunpack.c.h.b16 %v272
    %v498 = vunpack.c.l.b16 %v273
    %v499 = vunpack.c.l.b16 %v274
    %v500 = vunpack.c.h.b16 %v274
    %v501 = vunpack.c.l.b16 %v275
    %v502 = vunpack.c.l.b16 %v276
    %v503 = vunpack.c.h.b16 %v276
    %v504 = vunpack.c.l.b16 %v277
    %v505 = vunpack.c.l.b16 %v278
    %v506 = vunpack.c.h.b16 %v278
    %v507 = vunpack.c.l.b16 %v279
    %v508 = vunpack.c.l.b16 %v280
    %v509 = vunpack.c.h.b16 %v280
    %v510 = vunpack.c.l.b16 %v281
    %v511 = vunpack.c.l.b16 %v282
    %v512 = vunpack.c.h.b16 %v282
    %v513 = vunpack.c.l.b16 %v283
    %v514 = vunpack.c.l.b16 %v284
    %v515 = vunpack.c.h.b16 %v284
    %v516 = vunpack.c.l.b16 %v285
    %v517 = vunpack.c.l.b16 %v286
    %v518 = vunpack.c.h.b16 %v286
    %v519 = vunpack.c.l.b16 %v287
    %v520 = vunpack.c.l.b16 %v288
    %v521 = vunpack.c.h.b16 %v288
    %v522 = vunpack.c.l.b16 %v289
    %v523 = vunpack.c.l.b16 %v290
    %v524 = vunpack.c.h.b16 %v290
    %v525 = vunpack.c.l.b16 %v291
    %v526 = vunpack.c.l.b16 %v292
    %v527 = vunpack.c.h.b16 %v292
    %v528 = vunpack.c.l.b16 %v293
    %v529 = vunpack.c.l.b16 %v294
    %v530 = vunpack.c.h.b16 %v294
    %v531 = vunpack.c.l.b16 %v295
    %v532 = vunpack.c.l.b16 %v296
    %v533 = vunpack.c.h.b16 %v296
    %v534 = vunpack.c.l.b16 %v297
    %v535 = vunpack.c.l.b16 %v298
    %v536 = vunpack.c.h.b16 %v298
    %v537 = vunpack.c.l.b16 %v299
    %v538 = vunpack.c.l.b16 %v300
    %v539 = vunpack.c.h.b16 %v300
    %v540 = vunpack.c.l.b16 %v301
    %v541 = vunpack.c.l.b16 %v302
    %v542 = vunpack.c.h.b16 %v302
    %v543 = vunpack.c.l.b16 %v303
    %v544 = vunpack.c.l.b16 %v304
    %v545 = vunpack.c.h.b16 %v304
    %v546 = vunpack.c.l.b16 %v305
    %v547 = vunpack.c.l.b16 %v306
    %v548 = vunpack.c.h.b16 %v306
    %v549 = vunpack.c.l.b16 %v307
    %v550 = vunpack.c.l.b16 %v308
    %v551 = vunpack.c.h.b16 %v308
    %v552 = vunpack.c.l.b16 %v309
    %v553 = vunpack.c.l.b16 %v310
    %v554 = vunpack.c.h.b16 %v310
    %v555 = vunpack.c.l.b16 %v311
    %v556 = vunpack.c.l.b16 %v312
    %v557 = vunpack.c.h.b16 %v312
    %v558 = vunpack.c.l.b16 %v313
    %v559 = vunpack.c.l.b16 %v314
    %v560 = vunpack.c.h.b16 %v314
    %v561 = vunpack.c.l.b16 %v315
    %v562 = vunpack.c.l.b16 %v316
    %v563 = vunpack.c.h.b16 %v316
    %v564 = vunpack.c.l.b16 %v317
    %v565 = vunpack.c.l.b16 %v318
    %v566 = vunpack.c.h.b16 %v318
    %v567 = vunpack.c.l.b16 %v319
    %v568 = vunpack.c.l.b16 %v320
    %v569 = vunpack.c.h.b16 %v320
    %v570 = vunpack.c.l.b16 %v321
    %v571 = vunpack.c.l.b16 %v322
    %v572 = vunpack.c.h.b16 %v322
    %v573 = vunpack.c.l.b16 %v323
    %v574 = vunpack.c.l.b16 %v324
    %v575 = vunpack.c.h.b16 %v324
    %v576 = vunpack.c.l.b16 %v325
    %v577 = vunpack.c.l.b16 %v326
    %v578 = vunpack.c.h.b16 %v326
    %v579 = vunpack.c.l.b16 %v327
    %v580 = vunpack.c.l.b16 %v328
    %v581 = vunpack.c.h.b16 %v328
    %v582 = vunpack.c.l.b16 %v329
    %v583 = vunpack.c.l.b16 %v330
    %v584 = vunpack.c.h.b16 %v330
    %v585 = vunpack.c.l.b16 %v331
    %v586 = vunpack.c.l.b16 %v332
    %v587 = vunpack.c.h.b16 %v332
    %v588 = vunpack.c.l.b16 %v333
    %v589 = vunpack.c.l.b16 %v334
    %v590 = vunpack.c.h.b16 %v334
    %v591 = vunpack.c.l.b16 %v335
    %v592 = vunpack.c.l.b16 %v336
    %v593 = vunpack.c.h.b16 %v336
    %v594 = vunpack.c.l.b16 %v337
    %v595 = vunpack.c.l.b16 %v338
    %v596 = vunpack.c.h.b16 %v338
    %v597 = vunpack.c.l.b16 %v339
    %v598 = vunpack.c.l.b16 %v340
    %v599 = vunpack.c.h.b16 %v340
    %v600 = vunpack.c.l.b16 %v341
    %v601 = vunpack.c.l.b16 %v342
    %v602 = vunpack.c.h.b16 %v342
    %v603 = vunpack.c.l.b16 %v343
    %v604 = vunpack.c.l.b16 %v344
    %v605 = vunpack.c.h.b16 %v344
    %v606 = vunpack.c.l.b16 %v345
    %v607 = vunpack.c.l.b16 %v346
    %v608 = vunpack.c.h.b16 %v346
    %v609 = vunpack.c.l.b16 %v347
    %v610 = vunpack.c.l.b16 %v348
    %v611 = vunpack.c.h.b16 %v348
    %v612 = vunpack.c.l.b16 %v349
    %v613 = vunpack.c.l.b16 %v350
    %v614 = vunpack.c.h.b16 %v350
    %v615 = vunpack.c.l.b16 %v351
    %v616 = vunpack.c.l.b16 %v352
    %v617 = vunpack.c.h.b16 %v352
    %v618 = vunpack.c.l.b16 %v353
    %v619 = vunpack.c.l.b16 %v354
    %v620 = vunpack.c.h.b16 %v354
    %v621 = vunpack.c.l.b16 %v355
    %v622 = vunpack.c.l.b16 %v356
    %v623 = vunpack.c.h.b16 %v356
    %v624 = vunpack.c.l.b16 %v357
    %v625 = vpack.c.b16 %v478, %v475
    %v626 = vpack.c.b16 %v479, %v476
    %v627 = vpack.c.b16 %v480, %v477
    %v628 = vpack.c.b16 %v484, %v481
    %v629 = vpack.c.b16 %v485, %v482
    %v630 = vpack.c.b16 %v486, %v483
    %v631 = vpack.c.b16 %v490, %v487
    %v632 = vpack.c.b16 %v491, %v488
    %v633 = vpack.c.b16 %v492, %v489
    %v634 = vpack.c.b16 %v496, %v493
    %v635 = vpack.c.b16 %v497, %v494
    %v636 = vpack.c.b16 %v498, %v495
    %v637 = vpack.c.b16 %v502, %v499
    %v638 = vpack.c.b16 %v503, %v500
    %v639 = vpack.c.b16 %v504, %v501
    %v640 = vpack.c.b16 %v508, %v505
    %v641 = vpack.c.b16 %v509, %v506
    %v642 = vpack.c.b16 %v510, %v507
    %v643 = vpack.c.b16 %v514, %v511
    %v644 = vpack.c.b16 %v515, %v512
    %v645 = vpack.c.b16 %v516, %v513
    %v646 = vpack.c.b16 %v520, %v517
    %v647 = vpack.c.b16 %v521, %v518
    %v648 = vpack.c.b16 %v522, %v519
    %v649 = vpack.c.b16 %v526, %v523
    %v650 = vpack.c.b16 %v527, %v524
    %v651 = vpack.c.b16 %v528, %v525
    %v652 = vpack.c.b16 %v532, %v529
    %v653 = vpack.c.b16 %v533, %v530
    %v654 = vpack.c.b16 %v534, %v531
    %v655 = vpack.c.b16 %v538, %v535
    %v656 = vpack.c.b16 %v539, %v536
    %v657 = vpack.c.b16 %v540, %v537
    %v658 = vpack.c.b16 %v544, %v541
    %v659 = vpack.c.b16 %v545, %v542
    %v660 = vpack.c.b16 %v546, %v543
    %v661 = vpack.c.b16 %v550, %v547
    %v662 = vpack.c.b16 %v551, %v548
    %v663 = vpack.c.b16 %v552, %v549
    %v664 = vpack.c.b16 %v556, %v553
    %v665 = vpack.c.b16 %v557, %v554
    %v666 = vpack.c.b16 %v558, %v555
    %v667 = vpack.c.b16 %v562, %v559
    %v668 = vpack.c.b16 %v563, %v560
    %v669 = vpack.c.b16 %v564, %v561
    %v670 = vpack.c.b16 %v568, %v565
    %v671 = vpack.c.b16 %v569, %v566
    %v672 = vpack.c.b16 %v570, %v567
    %v673 = vpack.c.b16 %v574, %v571
    %v674 = vpack.c.b16 %v575, %v572
    %v675 = vpack.c.b16 %v576, %v573
    %v676 = vpack.c.b16 %v580, %v577
    %v677 = vpack.c.b16 %v581, %v578
    %v678 = vpack.c.b16 %v582, %v579
    %v679 = vpack.c.b16 %v586, %v583
    %v680 = vpack.c.b16 %v587, %v584
    %v681 = vpack.c.b16 %v588, %v585
    %v682 = vpack.c.b16 %v592, %v589
    %v683 = vpack.c.b16 %v593, %v590
    %v684 = vpack.c.b16 %v594, %v591
    %v685 = vpack.c.b16 %v598, %v595
    %v686 = vpack.c.b16 %v599, %v596
    %v687 = vpack.c.b16 %v600, %v597
    %v688 = vpack.c.b16 %v604, %v601
    %v689 = vpack.c.b16 %v605, %v602
    %v690 = vpack.c.b16 %v606, %v603
    %v691 = vpack.c.b16 %v610, %v607
    %v692 = vpack.c.b16 %v611, %v608
    %v693 = vpack.c.b16 %v612, %v609
    %v694 = vpack.c.b16 %v616, %v613
    %v695 = vpack.c.b16 %v617, %v614
    %v696 = vpack.c.b16 %v618, %v615
    %v697 = vpack.c.b16 %v622, %v619
    %v698 = vpack.c.b16 %v623, %v620
    %v699 = vpack.c.b16 %v624, %v621
    %vm775 = vcmask 130048
    %v777 = vsel %vm775, %v257, 0
    %779 = vmatprep.subr.bf16.mxu0 %v626
    %780 = vmatpush1.bf16.msra.mxu0 %v625
    %781 = vmatprep.subr.bf16.mxu0 %v629
    %782 = vmatpush1.bf16.msra.mxu0 %v628
    %783 = vmatprep.subr.bf16.mxu0 %v632
    %784 = vmatpush1.bf16.msra.mxu0 %v631
    %785 = vmatprep.subr.bf16.mxu0 %v635
    %786 = vmatpush1.bf16.msra.mxu0 %v634
    %787 = vmatprep.subr.bf16.mxu0 %v638
    %788 = vmatpush1.bf16.msra.mxu0 %v637
    %789 = vmatprep.subr.bf16.mxu0 %v641
    %790 = vmatpush1.bf16.msra.mxu0 %v640
    %791 = vmatprep.subr.bf16.mxu0 %v644
    %792 = vmatpush1.bf16.msra.mxu0 %v643
    %793 = vmatprep.subr.bf16.mxu0 %v647
    %794 = vmatpush1.bf16.msra.mxu0 %v646
    %795 = vmatprep.subr.bf16.mxu0 %v650
    %796 = vmatpush1.bf16.msra.mxu0 %v649
    %797 = vmatprep.subr.bf16.mxu0 %v653
    %798 = vmatpush1.bf16.msra.mxu0 %v652
    %799 = vmatprep.subr.bf16.mxu0 %v656
    %800 = vmatpush1.bf16.msra.mxu0 %v655
    %801 = vmatprep.subr.bf16.mxu0 %v659
    %802 = vmatpush1.bf16.msra.mxu0 %v658
    %803 = vmatprep.subr.bf16.mxu0 %v662
    %804 = vmatpush1.bf16.msra.mxu0 %v661
    %805 = vmatprep.subr.bf16.mxu0 %v665
    %806 = vmatpush1.bf16.msra.mxu0 %v664
    %807 = vmatprep.subr.bf16.mxu0 %v668
    %808 = vmatpush1.bf16.msra.mxu0 %v667
    %809 = vmatprep.subr.bf16.mxu0 %v671
    %810 = vmatpush1.bf16.msra.mxu0 %v670
    %811 = vmatprep.mubr.bf16.mxu0 %v255
    %812 = vmatmul.mubr.bf16.gmra.mrb[0].mxu0 %v254
    %v813 = vpop.f32.mrb[0].mxu0
    %v814 = vadd.f32 %v363, %v813
    %v815 = vpop.f32.mrb[0].mxu0
    %v816 = vadd.f32 %v367, %v815
    %v817 = vpop.f32.mrb[0].mxu0
    %v818 = vpop.f32.mrb[0].mxu0
    %819 = vdwg.mxu0
    %820 = vmatprep.subr.bf16.mxu0 %v674
    %821 = vmatpush1.bf16.msra.mxu0 %v673
    %822 = vmatprep.subr.bf16.mxu0 %v677
    %823 = vmatpush1.bf16.msra.mxu0 %v676
    %824 = vmatprep.subr.bf16.mxu0 %v680
    %825 = vmatpush1.bf16.msra.mxu0 %v679
    %826 = vmatprep.subr.bf16.mxu0 %v683
    %827 = vmatpush1.bf16.msra.mxu0 %v682
    %828 = vmatprep.subr.bf16.mxu0 %v686
    %829 = vmatpush1.bf16.msra.mxu0 %v685
    %830 = vmatprep.subr.bf16.mxu0 %v689
    %831 = vmatpush1.bf16.msra.mxu0 %v688
    %832 = vmatprep.subr.bf16.mxu0 %v692
    %833 = vmatpush1.bf16.msra.mxu0 %v691
    %834 = vmatprep.subr.bf16.mxu0 %v695
    %835 = vmatpush1.bf16.msra.mxu0 %v694
    %836 = vmatprep.subr.bf16.mxu0 %v698
    %837 = vmatpush1.bf16.msra.mxu0 %v697
    %838 = vmatprep.subr.bf16.mxu0 0
    %839 = vmatpush1.bf16.msra.mxu0 0
    %840 = vmatprep.subr.bf16.mxu0 0
    %841 = vmatpush1.bf16.msra.mxu0 0
    %842 = vmatprep.subr.bf16.mxu0 0
    %843 = vmatpush1.bf16.msra.mxu0 0
    %844 = vmatprep.subr.bf16.mxu0 0
    %845 = vmatpush1.bf16.msra.mxu0 0
    %846 = vmatprep.subr.bf16.mxu0 0
    %847 = vmatpush1.bf16.msra.mxu0 0
    %848 = vmatprep.subr.bf16.mxu0 0
    %849 = vmatpush1.bf16.msra.mxu0 0
    %850 = vmatprep.subr.bf16.mxu0 0
    %851 = vmatpush1.bf16.msra.mxu0 0
    %852 = vmatprep.mubr.bf16.mxu0 %v777
    %853 = vmatmul.mubr.bf16.gmra.mrb[0].mxu0 %v256
    %v854 = vpop.f32.mrb[0].mxu0
    %v855 = vadd.f32 %v814, %v854
    %v856 = vpop.f32.mrb[0].mxu0
    %v857 = vadd.f32 %v816, %v856
    %v858 = vpop.f32.mrb[0].mxu0
    %v859 = vpop.f32.mrb[0].mxu0
    %860 = vdwg.mxu0
    %861 = vmatprep.subr.bf16.mxu0 0
    %862 = vmatpush1.bf16.msra.mxu0 %v627
    %863 = vmatprep.subr.bf16.mxu0 0
    %864 = vmatpush1.bf16.msra.mxu0 %v630
    %865 = vmatprep.subr.bf16.mxu0 0
    %866 = vmatpush1.bf16.msra.mxu0 %v633
    %867 = vmatprep.subr.bf16.mxu0 0
    %868 = vmatpush1.bf16.msra.mxu0 %v636
    %869 = vmatprep.subr.bf16.mxu0 0
    %870 = vmatpush1.bf16.msra.mxu0 %v639
    %871 = vmatprep.subr.bf16.mxu0 0
    %872 = vmatpush1.bf16.msra.mxu0 %v642
    %873 = vmatprep.subr.bf16.mxu0 0
    %874 = vmatpush1.bf16.msra.mxu0 %v645
    %875 = vmatprep.subr.bf16.mxu0 0
    %876 = vmatpush1.bf16.msra.mxu0 %v648
    %877 = vmatprep.subr.bf16.mxu0 0
    %878 = vmatpush1.bf16.msra.mxu0 %v651
    %879 = vmatprep.subr.bf16.mxu0 0
    %880 = vmatpush1.bf16.msra.mxu0 %v654
    %881 = vmatprep.subr.bf16.mxu0 0
    %882 = vmatpush1.bf16.msra.mxu0 %v657
    %883 = vmatprep.subr.bf16.mxu0 0
    %884 = vmatpush1.bf16.msra.mxu0 %v660
    %885 = vmatprep.subr.bf16.mxu0 0
    %886 = vmatpush1.bf16.msra.mxu0 %v663
    %887 = vmatprep.subr.bf16.mxu0 0
    %888 = vmatpush1.bf16.msra.mxu0 %v666
    %889 = vmatprep.subr.bf16.mxu0 0
    %890 = vmatpush1.bf16.msra.mxu0 %v669
    %891 = vmatprep.subr.bf16.mxu0 0
    %892 = vmatpush1.bf16.msra.mxu0 %v672
    %893 = vmatprep.mubr.bf16.mxu0 %v255
    %894 = vmatmul.mubr.bf16.gmra.mrb[0].mxu0 %v254
    %v895 = vpop.f32.mrb[0].mxu0
    %v896 = vadd.f32 %v371, %v895
    %v897 = vpop.f32.mrb[0].mxu0
    %v898 = vpop.f32.mrb[0].mxu0
    %v899 = vpop.f32.mrb[0].mxu0
    %900 = vdwg.mxu0
    %901 = vmatprep.subr.bf16.mxu0 0
    %902 = vmatpush1.bf16.msra.mxu0 %v675
    %903 = vmatprep.subr.bf16.mxu0 0
    %904 = vmatpush1.bf16.msra.mxu0 %v678
    %905 = vmatprep.subr.bf16.mxu0 0
    %906 = vmatpush1.bf16.msra.mxu0 %v681
    %907 = vmatprep.subr.bf16.mxu0 0
    %908 = vmatpush1.bf16.msra.mxu0 %v684
    %909 = vmatprep.subr.bf16.mxu0 0
    %910 = vmatpush1.bf16.msra.mxu0 %v687
    %911 = vmatprep.subr.bf16.mxu0 0
    %912 = vmatpush1.bf16.msra.mxu0 %v690
    %913 = vmatprep.subr.bf16.mxu0 0
    %914 = vmatpush1.bf16.msra.mxu0 %v693
    %915 = vmatprep.subr.bf16.mxu0 0
    %916 = vmatpush1.bf16.msra.mxu0 %v696
    %917 = vmatprep.subr.bf16.mxu0 0
    %918 = vmatpush1.bf16.msra.mxu0 %v699
    %919 = vmatprep.subr.bf16.mxu0 0
    %920 = vmatpush1.bf16.msra.mxu0 0
    %921 = vmatprep.subr.bf16.mxu0 0
    %922 = vmatpush1.bf16.msra.mxu0 0
    %923 = vmatprep.subr.bf16.mxu0 0
    %924 = vmatpush1.bf16.msra.mxu0 0
    %925 = vmatprep.subr.bf16.mxu0 0
    %926 = vmatpush1.bf16.msra.mxu0 0
    %927 = vmatprep.subr.bf16.mxu0 0
    %928 = vmatpush1.bf16.msra.mxu0 0
    %929 = vmatprep.subr.bf16.mxu0 0
    %930 = vmatpush1.bf16.msra.mxu0 0
    %931 = vmatprep.subr.bf16.mxu0 0
    %932 = vmatpush1.bf16.msra.mxu0 0
    %933 = vmatprep.mubr.bf16.mxu0 %v777
    %934 = vmatmul.mubr.bf16.gmra.mrb[0].mxu0 %v256
    %v935 = vpop.f32.mrb[0].mxu0
    %v936 = vadd.f32 %v896, %v935
    %v937 = vpop.f32.mrb[0].mxu0
    %v938 = vpop.f32.mrb[0].mxu0
    %v939 = vpop.f32.mrb[0].mxu0
    %940 = vdwg.mxu0
    %v941 = vmax.f32 %v855, 0.0
    %v942 = vmax.f32 %v857, 0.0
    %v943 = vmax.f32 %v936, 0.0
    %v944 = vpack.c.bf16 %v941, %v941
    %v945 = vpack.c.bf16 %v942, %v942
    %v946 = vpack.c.bf16 %v943, %v943
    %v947 = vld [vmem:[#allocation7] sm:$0xf]
    %v948 = vld [vmem:[#allocation7 + $0x4] sm:$0xf]
    %v949 = vld [vmem:[#allocation7 + $0x8] sm:$0xf]
    %v950 = vld [vmem:[#allocation7 + $0xc] sm:$0xf]
    %v951 = vld [vmem:[#allocation7 + $0x10] sm:$0xf]
    %v952 = vld [vmem:[#allocation7 + $0x14] sm:$0xf]
    %v953 = vld [vmem:[#allocation7 + $0x18] sm:$0xf]
    %v954 = vld [vmem:[#allocation7 + $0x1c] sm:$0xf]
    %v955 = vld [vmem:[#allocation7 + $0x20] sm:$0xf]
    %v956 = vld [vmem:[#allocation7 + $0x24] sm:$0xf]
    %v957 = vld [vmem:[#allocation7 + $0x28] sm:$0xf]
    %v958 = vld [vmem:[#allocation7 + $0x2c] sm:$0xf]
    %v959 = vld [vmem:[#allocation7 + $0x30] sm:$0xf]
    %v960 = vld [vmem:[#allocation7 + $0x34] sm:$0xf]
    %v961 = vld [vmem:[#allocation7 + $0x38] sm:$0xf]
    %v962 = vld [vmem:[#allocation7 + $0x3c] sm:$0xf]
    %v963 = vld [vmem:[#allocation7 + $0x40] sm:$0xf]
    %v964 = vld [vmem:[#allocation7 + $0x44] sm:$0xf]
    %v965 = vld [vmem:[#allocation7 + $0x48] sm:$0xf]
    %v966 = vld [vmem:[#allocation7 + $0x4c] sm:$0xf]
    %v967 = vld [vmem:[#allocation7 + $0x50] sm:$0xf]
    %v968 = vld [vmem:[#allocation7 + $0x54] sm:$0xf]
    %v969 = vld [vmem:[#allocation7 + $0x58] sm:$0xf]
    %v970 = vld [vmem:[#allocation7 + $0x5c] sm:$0xf]
    %v971 = vld [vmem:[#allocation7 + $0x60] sm:$0xf]
    %v972 = vld [vmem:[#allocation7 + $0x64] sm:$0xf]
    %v973 = vld [vmem:[#allocation7 + $0x68] sm:$0xf]
    %v974 = vld [vmem:[#allocation7 + $0x6c] sm:$0xf]
    %v975 = vld [vmem:[#allocation7 + $0x70] sm:$0xf]
    %v976 = vld [vmem:[#allocation7 + $0x74] sm:$0xf]
    %v977 = vld [vmem:[#allocation7 + $0x78] sm:$0xf]
    %v978 = vld [vmem:[#allocation7 + $0x7c] sm:$0xf]
    %v979 = vld [vmem:[#allocation7 + $0x80] sm:$0xf]
    %v980 = vld [vmem:[#allocation7 + $0x84] sm:$0xf]
    %v981 = vld [vmem:[#allocation7 + $0x88] sm:$0xf]
    %v982 = vld [vmem:[#allocation7 + $0x8c] sm:$0xf]
    %v983 = vld [vmem:[#allocation7 + $0x90] sm:$0xf]
    %v984 = vld [vmem:[#allocation7 + $0x94] sm:$0x3]
    %v985 = vld [vmem:[%s6] sm:$0x1]
    %v987 = vlaneseq
    %v988 = vshrl.u32 %v987, 7
    %v989 = vsub.s32 0, %v988
    %v990 = vrot.slane %v985, %v989
    %v1030 = vunpack.c.l.b16 %v947
    %v1031 = vunpack.c.l.b16 %v948
    %v1032 = vunpack.c.l.b16 %v949
    %v1033 = vunpack.c.l.b16 %v950
    %v1034 = vunpack.c.l.b16 %v951
    %v1035 = vunpack.c.l.b16 %v952
    %v1036 = vunpack.c.l.b16 %v953
    %v1037 = vunpack.c.l.b16 %v954
    %v1038 = vunpack.c.l.b16 %v955
    %v1039 = vunpack.c.l.b16 %v956
    %v1040 = vunpack.c.l.b16 %v957
    %v1041 = vunpack.c.l.b16 %v958
    %v1042 = vunpack.c.l.b16 %v959
    %v1043 = vunpack.c.l.b16 %v960
    %v1044 = vunpack.c.l.b16 %v961
    %v1045 = vunpack.c.l.b16 %v962
    %v1046 = vunpack.c.l.b16 %v963
    %v1047 = vunpack.c.l.b16 %v964
    %v1048 = vunpack.c.l.b16 %v965
    %v1049 = vunpack.c.l.b16 %v966
    %v1050 = vunpack.c.l.b16 %v967
    %v1051 = vunpack.c.l.b16 %v968
    %v1052 = vunpack.c.l.b16 %v969
    %v1053 = vunpack.c.l.b16 %v970
    %v1054 = vunpack.c.l.b16 %v971
    %v1055 = vunpack.c.l.b16 %v972
    %v1056 = vunpack.c.l.b16 %v973
    %v1057 = vunpack.c.l.b16 %v974
    %v1058 = vunpack.c.l.b16 %v975
    %v1059 = vunpack.c.l.b16 %v976
    %v1060 = vunpack.c.l.b16 %v977
    %v1061 = vunpack.c.l.b16 %v978
    %v1062 = vunpack.c.l.b16 %v979
    %v1063 = vunpack.c.l.b16 %v980
    %v1064 = vunpack.c.l.b16 %v981
    %v1065 = vunpack.c.l.b16 %v982
    %v1066 = vunpack.c.l.b16 %v983
    %v1067 = vunpack.c.l.b16 %v984
    %v1068 = vpack.c.b16 %v1031, %v1030
    %v1069 = vpack.c.b16 %v1033, %v1032
    %v1070 = vpack.c.b16 %v1035, %v1034
    %v1071 = vpack.c.b16 %v1037, %v1036
    %v1072 = vpack.c.b16 %v1039, %v1038
    %v1073 = vpack.c.b16 %v1041, %v1040
    %v1074 = vpack.c.b16 %v1043, %v1042
    %v1075 = vpack.c.b16 %v1045, %v1044
    %v1076 = vpack.c.b16 %v1047, %v1046
    %v1077 = vpack.c.b16 %v1049, %v1048
    %v1078 = vpack.c.b16 %v1051, %v1050
    %v1079 = vpack.c.b16 %v1053, %v1052
    %v1080 = vpack.c.b16 %v1055, %v1054
    %v1081 = vpack.c.b16 %v1057, %v1056
    %v1082 = vpack.c.b16 %v1059, %v1058
    %v1083 = vpack.c.b16 %v1061, %v1060
    %v1084 = vpack.c.b16 %v1063, %v1062
    %v1085 = vpack.c.b16 %v1065, %v1064
    %v1086 = vpack.c.b16 %v1067, %v1066
    %vm1105 = vcmask 359424
    %v1107 = vsel %vm1105, %v946, 0
    %vm1109 = vcmask 1045504
    %v1111 = vsel %vm1109, %v1086, 0
    %1113 = vmatprep.subr.bf16.mxu0 0
    %1114 = vmatpush1.bf16.msra.mxu0 %v1068
    %1115 = vmatprep.subr.bf16.mxu0 0
    %1116 = vmatpush1.bf16.msra.mxu0 %v1069
    %1117 = vmatprep.subr.bf16.mxu0 0
    %1118 = vmatpush1.bf16.msra.mxu0 %v1070
    %1119 = vmatprep.subr.bf16.mxu0 0
    %1120 = vmatpush1.bf16.msra.mxu0 %v1071
    %1121 = vmatprep.subr.bf16.mxu0 0
    %1122 = vmatpush1.bf16.msra.mxu0 %v1072
    %1123 = vmatprep.subr.bf16.mxu0 0
    %1124 = vmatpush1.bf16.msra.mxu0 %v1073
    %1125 = vmatprep.subr.bf16.mxu0 0
    %1126 = vmatpush1.bf16.msra.mxu0 %v1074
    %1127 = vmatprep.subr.bf16.mxu0 0
    %1128 = vmatpush1.bf16.msra.mxu0 %v1075
    %1129 = vmatprep.subr.bf16.mxu0 0
    %1130 = vmatpush1.bf16.msra.mxu0 %v1076
    %1131 = vmatprep.subr.bf16.mxu0 0
    %1132 = vmatpush1.bf16.msra.mxu0 %v1077
    %1133 = vmatprep.subr.bf16.mxu0 0
    %1134 = vmatpush1.bf16.msra.mxu0 %v1078
    %1135 = vmatprep.subr.bf16.mxu0 0
    %1136 = vmatpush1.bf16.msra.mxu0 %v1079
    %1137 = vmatprep.subr.bf16.mxu0 0
    %1138 = vmatpush1.bf16.msra.mxu0 %v1080
    %1139 = vmatprep.subr.bf16.mxu0 0
    %1140 = vmatpush1.bf16.msra.mxu0 %v1081
    %1141 = vmatprep.subr.bf16.mxu0 0
    %1142 = vmatpush1.bf16.msra.mxu0 %v1082
    %1143 = vmatprep.subr.bf16.mxu0 0
    %1144 = vmatpush1.bf16.msra.mxu0 %v1083
    %1145 = vmatprep.mubr.bf16.mxu0 %v945
    %1146 = vmatmul.mubr.bf16.gmra.mrb[0].mxu0 %v944
    %v1147 = vpop.f32.mrb[0].mxu0
    %v1148 = vadd.f32 %v990, %v1147
    %v1149 = vpop.f32.mrb[0].mxu0
    %v1150 = vpop.f32.mrb[0].mxu0
    %v1151 = vpop.f32.mrb[0].mxu0
    %1152 = vdwg.mxu0
    %1153 = vmatprep.subr.bf16.mxu0 0
    %1154 = vmatpush1.bf16.msra.mxu0 %v1084
    %1155 = vmatprep.subr.bf16.mxu0 0
    %1156 = vmatpush1.bf16.msra.mxu0 %v1085
    %1157 = vmatprep.subr.bf16.mxu0 0
    %1158 = vmatpush1.bf16.msra.mxu0 %v1111
    %1159 = vmatprep.subr.bf16.mxu0 0
    %1160 = vmatpush1.bf16.msra.mxu0 0
    %1161 = vmatprep.subr.bf16.mxu0 0
    %1162 = vmatpush1.bf16.msra.mxu0 0
    %1163 = vmatprep.subr.bf16.mxu0 0
    %1164 = vmatpush1.bf16.msra.mxu0 0
    %1165 = vmatprep.subr.bf16.mxu0 0
    %1166 = vmatpush1.bf16.msra.mxu0 0
    %1167 = vmatprep.subr.bf16.mxu0 0
    %1168 = vmatpush1.bf16.msra.mxu0 0
    %1169 = vmatprep.subr.bf16.mxu0 0
    %1170 = vmatpush1.bf16.msra.mxu0 0
    %1171 = vmatprep.subr.bf16.mxu0 0
    %1172 = vmatpush1.bf16.msra.mxu0 0
    %1173 = vmatprep.subr.bf16.mxu0 0
    %1174 = vmatpush1.bf16.msra.mxu0 0
    %1175 = vmatprep.subr.bf16.mxu0 0
    %1176 = vmatpush1.bf16.msra.mxu0 0
    %1177 = vmatprep.subr.bf16.mxu0 0
    %1178 = vmatpush1.bf16.msra.mxu0 0
    %1179 = vmatprep.subr.bf16.mxu0 0
    %1180 = vmatpush1.bf16.msra.mxu0 0
    %1181 = vmatprep.subr.bf16.mxu0 0
    %1182 = vmatpush1.bf16.msra.mxu0 0
    %1183 = vmatprep.subr.bf16.mxu0 0
    %1184 = vmatpush1.bf16.msra.mxu0 0
    %1185 = vmatprep.mubr.bf16.mxu0 0
    %1186 = vmatmul.mubr.bf16.gmra.mrb[0].mxu0 %v1107
    %v1187 = vpop.f32.mrb[0].mxu0
    %v1188 = vadd.f32 %v1148, %v1187
    %v1189 = vpop.f32.mrb[0].mxu0
    %v1190 = vpop.f32.mrb[0].mxu0
    %v1191 = vpop.f32.mrb[0].mxu0
    %1192 = vdwg.mxu0
    %v1193 = vtanh.pop %v1188
    %1194 = vst [vmem:[%s7] sm:$0x3] %v1193
    // Predicated region
    $region46: #{_actor_forward.1} parent=1 // pred_check
      _
    $region47: #{_actor_forward.1} parent=1 // pred_check_branch
      %1196 = sbr.rel (0) target = $region49
    $region48: #{_actor_forward.1} parent=1 // pred_region
      _
    $region49: #{_actor_forward.1} parent=1 // pred_fallthru
      _
    // Predicated region
    $region50: #{_actor_forward.1} parent=1 // pred_check
      _
    $region51: #{_actor_forward.1} parent=1 // pred_check_branch
      %1198 = sbr.rel (0) target = $region53
    $region52: #{_actor_forward.1} parent=1 // pred_region
      _
    $region53: #{_actor_forward.1} parent=1 // pred_fallthru
      _
    %1199 = vsyncpa [#allocation3], 1
    %1200 = vsyncpa [#allocation5], 1
    %1201 = vsyncpa [#allocation8], 1

// kernel: _actor_forward.1
$region0: #{_actor_forward.1}
  #allocation0 [shape = 'u32[]', space=smem, size = 0x4, offset = 0x4, fixed_abs, tag = 'smem constant byte address 0x4 - core index']
  #allocation1 [shape = 'u32[144,128]{1,0:T(1,128)}', space=vmem, size = 0x12000, scoped, tag = 'internal scratch']
  %s0 = inlined_call_operand.hbm [shape: f32[2,3], index: 0, kind: input, shape index: {}]
  %s1 = inlined_call_operand.hbm [shape: f32[3,400], index: 1, kind: input, shape index: {}]
  %s2 = inlined_call_operand.vmem [shape: f32[1,400], index: 2, kind: input, shape index: {}]
  %s3 = inlined_call_operand.hbm [shape: bf16[400,300], index: 3, kind: input, shape index: {}]
  %s4 = inlined_call_operand.vmem [shape: f32[1,300], index: 4, kind: input, shape index: {}]
  %s5 = inlined_call_operand.hbm [shape: bf16[300,128], index: 5, kind: input, shape index: {}]
  %s6 = inlined_call_operand.vmem [shape: f32[1,128], index: 6, kind: input, shape index: {}]
  %s7 = inlined_call_operand.vmem [shape: f32[2,128], index: 7, kind: output, shape index: {}]
  %s8 = sld [smem:[#allocation0]]
  $region54: #{_actor_forward.1} parent=0
    _
  %s10 = ssub.s32 1, %s8
  %s11 = scalar_select 0, %s10, %s8
  $region1: #{_actor_forward.1} parent=0
    #allocation2 [shape = 'u8[1024]{0}', space=vmem, size = 0x400, scoped, tag = 'input window, operand 0, single buffered']
    #allocation3 [shape = 's32[1]{0}', space=sflag, size = 0x4, scoped, tag = 'scoped memory for _actor_forward.1']
    #allocation4 [shape = 'u8[8192]{0}', space=vmem, size = 0x2000, scoped, tag = 'input window, operand 1, single buffered']
    #allocation5 [shape = 's32[1]{0}', space=sflag, size = 0x4, scoped, tag = 'scoped memory for _actor_forward.1']
    #allocation6 [shape = 'u8[307200]{0}', space=vmem, size = 0x4b000, scoped, tag = 'input window, operand 3, single buffered']
    #allocation7 [shape = 'u8[77824]{0}', space=vmem, size = 0x13000, scoped, tag = 'input window, operand 5, single buffered']
    #allocation8 [shape = 's32[1]{0}', space=sflag, size = 0x4, scoped, tag = 'scoped memory for _actor_forward.1']
    %12 = vsyncpa [#allocation3], 0
    %13 = vsyncpa [#allocation5], 0
    %14 = vsyncpa [#allocation8], 0
    // Predicated region
    $region2: #{_actor_forward.1} parent=1 // pred_check
      _
    $region3: #{_actor_forward.1} parent=1 // pred_check_branch
      %16 = sbr.rel (0) target = $region5
    $region4: #{_actor_forward.1} parent=1 // pred_region
      %s18 = ssub.s32 32, 32
      %19 = vsyncadd [#allocation3], %s18
      %s21 = sshll.u32 [#allocation2], 4
      %s22 = int_to_ptr.vmem [resolvable:$true] %s21
      %24 = dma.hbm_to_vmem [thread:$0]  %s0, 32, %s22, [#allocation3]
    $region5: #{_actor_forward.1} parent=1 // pred_fallthru
      _
    // Predicated region
    $region6: #{_actor_forward.1} parent=1 // pred_check
      _
    $region7: #{_actor_forward.1} parent=1 // pred_check_branch
      %26 = sbr.rel (0) target = $region9
    $region8: #{_actor_forward.1} parent=1 // pred_region
      %s28 = ssub.s32 256, 256
      %29 = vsyncadd [#allocation5], %s28
      %s31 = sshll.u32 [#allocation4], 4
      %s32 = int_to_ptr.vmem [resolvable:$true] %s31
      %34 = dma.hbm_to_vmem [thread:$0]  %s1, 256, %s32, [#allocation5]
    $region9: #{_actor_forward.1} parent=1 // pred_fallthru
      _
    // Predicated region
    $region10: #{_actor_forward.1} parent=1 // pred_check
      _
    $region11: #{_actor_forward.1} parent=1 // pred_check_branch
      %36 = sbr.rel (0) target = $region13
    $region12: #{_actor_forward.1} parent=1 // pred_region
      _
    $region13: #{_actor_forward.1} parent=1 // pred_fallthru
      _
    // Predicated region
    $region14: #{_actor_forward.1} parent=1 // pred_check
      _
    $region15: #{_actor_forward.1} parent=1 // pred_check_branch
      %38 = sbr.rel (0) target = $region17
    $region16: #{_actor_forward.1} parent=1 // pred_region
      %s40 = ssub.s32 9600, 9600
      %41 = vsyncadd [#allocation5], %s40
      %s42 = sshll.u32 [#allocation6], 4
      %s43 = int_to_ptr.vmem [resolvable:$true] %s42
      %48 = dma.hbm_to_vmem [thread:$0]  %s3, 9600, %s43, [#allocation5], 192, 192, 12
    $region17: #{_actor_forward.1} parent=1 // pred_fallthru
      _
    // Predicated region
    $region18: #{_actor_forward.1} parent=1 // pred_check
      _
    $region19: #{_actor_forward.1} parent=1 // pred_check_branch
      %50 = sbr.rel (0) target = $region21
    $region20: #{_actor_forward.1} parent=1 // pred_region
      _
    $region21: #{_actor_forward.1} parent=1 // pred_fallthru
      _
    // Predicated region
    $region22: #{_actor_forward.1} parent=1 // pred_check
      _
    $region23: #{_actor_forward.1} parent=1 // pred_check_branch
      %52 = sbr.rel (0) target = $region25
    $region24: #{_actor_forward.1} parent=1 // pred_region
      %s54 = ssub.s32 2432, 2432
      %55 = vsyncadd [#allocation8], %s54
      %s56 = sshll.u32 [#allocation7], 4
      %s57 = int_to_ptr.vmem [resolvable:$true] %s56
      %62 = dma.hbm_to_vmem [thread:$0]  %s5, 2432, %s57, [#allocation8], 64, 64, 4
    $region25: #{_actor_forward.1} parent=1 // pred_fallthru
      _
    // Predicated region
    $region26: #{_actor_forward.1} parent=1 // pred_check
      _
    $region27: #{_actor_forward.1} parent=1 // pred_check_branch
      %64 = sbr.rel (0) target = $region29
    $region28: #{_actor_forward.1} parent=1 // pred_region
      _
    $region29: #{_actor_forward.1} parent=1 // pred_fallthru
      _
    // Predicated region
    $region30: #{_actor_forward.1} parent=1 // pred_check
      _
    $region31: #{_actor_forward.1} parent=1 // pred_check_branch
      %66 = sbr.rel (0) target = $region33
    $region32: #{_actor_forward.1} parent=1 // pred_region
      %67 = dma.done [#allocation3], 32
    $region33: #{_actor_forward.1} parent=1 // pred_fallthru
      _
    // Predicated region
    $region34: #{_actor_forward.1} parent=1 // pred_check
      _
    $region35: #{_actor_forward.1} parent=1 // pred_check_branch
      %69 = sbr.rel (0) target = $region37
    $region36: #{_actor_forward.1} parent=1 // pred_region
      %70 = dma.done [#allocation5], 256
    $region37: #{_actor_forward.1} parent=1 // pred_fallthru
      _
    // Predicated region
    $region38: #{_actor_forward.1} parent=1 // pred_check
      _
    $region39: #{_actor_forward.1} parent=1 // pred_check_branch
      %72 = sbr.rel (0) target = $region41
    $region40: #{_actor_forward.1} parent=1 // pred_region
      %73 = dma.done [#allocation5], 9600
    $region41: #{_actor_forward.1} parent=1 // pred_fallthru
      _
    // Predicated region
    $region42: #{_actor_forward.1} parent=1 // pred_check
      _
    $region43: #{_actor_forward.1} parent=1 // pred_check_branch
      %75 = sbr.rel (0) target = $region45
    $region44: #{_actor_forward.1} parent=1 // pred_region
      %76 = dma.done [#allocation8], 2432
    $region45: #{_actor_forward.1} parent=1 // pred_fallthru
      _
    %v78 = vld [vmem:[#allocation2] sm:$0x3]
    %v79 = vld [vmem:[#allocation4] sm:$0x77]
    %v80 = vld [vmem:[#allocation4 + $0x8] sm:$0x77]
    %v81 = vld [vmem:[%s2] sm:$0xf]
    %83 = vset.pattern.permute.xlu0 0
    %84 = vperm.xlu0 %83, %v78
    %v85 = vpop.permute.xlu0 %84
    %v89 = vlaneseq
    %v90 = vshrl.u32 %v89, 7
    %v91 = vsub.s32 0, %v90
    %v92 = vrot.slane %v79, %v91
    %v93 = vlaneseq
    %v94 = vshrl.u32 %v93, 7
    %v95 = vsub.s32 4, %v94
    %v96 = vrot.slane %v79, %v95
    %v97 = vlaneseq
    %v98 = vshrl.u32 %v97, 7
    %v99 = vsub.s32 0, %v98
    %v100 = vrot.slane %v80, %v99
    %v101 = vlaneseq
    %v102 = vshrl.u32 %v101, 7
    %v103 = vsub.s32 4, %v102
    %v104 = vrot.slane %v80, %v103
    %v109 = vlaneseq
    %v110 = vshrl.u32 %v109, 7
    %v111 = vsub.s32 0, %v110
    %v112 = vrot.slane %v92, %v111
    %v113 = vlaneseq
    %v114 = vshrl.u32 %v113, 7
    %v115 = vsub.s32 0, %v114
    %v116 = vrot.slane %v96, %v115
    %v117 = vlaneseq
    %v118 = vshrl.u32 %v117, 7
    %v119 = vsub.s32 0, %v118
    %v120 = vrot.slane %v100, %v119
    %v121 = vlaneseq
    %v122 = vshrl.u32 %v121, 7
    %v123 = vsub.s32 0, %v122
    %v124 = vrot.slane %v104, %v123
    %v125 = vmul.f32 %v85, %v112
    %v126 = vmul.f32 %v85, %v116
    %v127 = vmul.f32 %v85, %v120
    %v128 = vmul.f32 %v85, %v124
    %v130 = vlaneseq
    %v131 = vshrl.u32 %v130, 7
    %v132 = vsub.s32 0, %v131
    %v133 = vrot.slane %v81, %v132
    %v134 = vlaneseq
    %v135 = vshrl.u32 %v134, 7
    %v136 = vsub.s32 1, %v135
    %v137 = vrot.slane %v81, %v136
    %v138 = vlaneseq
    %v139 = vshrl.u32 %v138, 7
    %v140 = vsub.s32 2, %v139
    %v141 = vrot.slane %v81, %v140
    %v142 = vlaneseq
    %v143 = vshrl.u32 %v142, 7
    %v144 = vsub.s32 3, %v143
    %v145 = vrot.slane %v81, %v144
    %v150 = vadd.f32 %v133, %v125
    %v151 = vadd.f32 %v137, %v126
    %v152 = vadd.f32 %v141, %v127
    %v153 = vadd.f32 %v145, %v128
    %154 = vset.pattern.permute.xlu0 1
    %155 = vperm.xlu0 %154, %v78
    %v156 = vpop.permute.xlu0 %155
    %v158 = vlaneseq
    %v159 = vshrl.u32 %v158, 7
    %v160 = vsub.s32 1, %v159
    %v161 = vrot.slane %v79, %v160
    %v162 = vlaneseq
    %v163 = vshrl.u32 %v162, 7
    %v164 = vsub.s32 5, %v163
    %v165 = vrot.slane %v79, %v164
    %v166 = vlaneseq
    %v167 = vshrl.u32 %v166, 7
    %v168 = vsub.s32 1, %v167
    %v169 = vrot.slane %v80, %v168
    %v170 = vlaneseq
    %v171 = vshrl.u32 %v170, 7
    %v172 = vsub.s32 5, %v171
    %v173 = vrot.slane %v80, %v172
    %v178 = vlaneseq
    %v179 = vshrl.u32 %v178, 7
    %v180 = vsub.s32 1, %v179
    %v181 = vrot.slane %v161, %v180
    %v182 = vlaneseq
    %v183 = vshrl.u32 %v182, 7
    %v184 = vsub.s32 1, %v183
    %v185 = vrot.slane %v165, %v184
    %v186 = vlaneseq
    %v187 = vshrl.u32 %v186, 7
    %v188 = vsub.s32 1, %v187
    %v189 = vrot.slane %v169, %v188
    %v190 = vlaneseq
    %v191 = vshrl.u32 %v190, 7
    %v192 = vsub.s32 1, %v191
    %v193 = vrot.slane %v173, %v192
    %v194 = vmul.f32 %v156, %v181
    %v195 = vmul.f32 %v156, %v185
    %v196 = vmul.f32 %v156, %v189
    %v197 = vmul.f32 %v156, %v193
    %v198 = vadd.f32 %v150, %v194
    %v199 = vadd.f32 %v151, %v195
    %v200 = vadd.f32 %v152, %v196
    %v201 = vadd.f32 %v153, %v197
    %202 = vset.pattern.permute.xlu0 2
    %203 = vperm.xlu0 %202, %v78
    %v204 = vpop.permute.xlu0 %203
    %v206 = vlaneseq
    %v207 = vshrl.u32 %v206, 7
    %v208 = vsub.s32 2, %v207
    %v209 = vrot.slane %v79, %v208
    %v210 = vlaneseq
    %v211 = vshrl.u32 %v210, 7
    %v212 = vsub.s32 6, %v211
    %v213 = vrot.slane %v79, %v212
    %v214 = vlaneseq
    %v215 = vshrl.u32 %v214, 7
    %v216 = vsub.s32 2, %v215
    %v217 = vrot.slane %v80, %v216
    %v218 = vlaneseq
    %v219 = vshrl.u32 %v218, 7
    %v220 = vsub.s32 6, %v219
    %v221 = vrot.slane %v80, %v220
    %v226 = vlaneseq
    %v227 = vshrl.u32 %v226, 7
    %v228 = vsub.s32 2, %v227
    %v229 = vrot.slane %v209, %v228
    %v230 = vlaneseq
    %v231 = vshrl.u32 %v230, 7
    %v232 = vsub.s32 2, %v231
    %v233 = vrot.slane %v213, %v232
    %v234 = vlaneseq
    %v235 = vshrl.u32 %v234, 7
    %v236 = vsub.s32 2, %v235
    %v237 = vrot.slane %v217, %v236
    %v238 = vlaneseq
    %v239 = vshrl.u32 %v238, 7
    %v240 = vsub.s32 2, %v239
    %v241 = vrot.slane %v221, %v240
    %v242 = vmul.f32 %v204, %v229
    %v243 = vmul.f32 %v204, %v233
    %v244 = vmul.f32 %v204, %v237
    %v245 = vmul.f32 %v204, %v241
    %v246 = vadd.f32 %v198, %v242
    %v247 = vadd.f32 %v199, %v243
    %v248 = vadd.f32 %v200, %v244
    %v249 = vadd.f32 %v201, %v245
    %v250 = vmax.f32 %v246, 0.0
    %v251 = vmax.f32 %v247, 0.0
    %v252 = vmax.f32 %v248, 0.0
    %v253 = vmax.f32 %v249, 0.0
    %v254 = vpack.c.bf16 %v250, %v250
    %v255 = vpack.c.bf16 %v251, %v251
    %v256 = vpack.c.bf16 %v252, %v252
    %v257 = vpack.c.bf16 %v253, %v253
    %v258 = vld [vmem:[#allocation6] sm:$0xff]
    %v259 = vld [vmem:[#allocation6 + $0x8] sm:$0xf]
    %v260 = vld [vmem:[#allocation6 + $0xc] sm:$0xff]
    %v261 = vld [vmem:[#allocation6 + $0x14] sm:$0xf]
    %v262 = vld [vmem:[#allocation6 + $0x18] sm:$0xff]
    %v263 = vld [vmem:[#allocation6 + $0x20] sm:$0xf]
    %v264 = vld [vmem:[#allocation6 + $0x24] sm:$0xff]
    %v265 = vld [vmem:[#allocation6 + $0x2c] sm:$0xf]
    %v266 = vld [vmem:[#allocation6 + $0x30] sm:$0xff]
    %v267 = vld [vmem:[#allocation6 + $0x38] sm:$0xf]
    %v268 = vld [vmem:[#allocation6 + $0x3c] sm:$0xff]
    %v269 = vld [vmem:[#allocation6 + $0x44] sm:$0xf]
    %v270 = vld [vmem:[#allocation6 + $0x48] sm:$0xff]
    %v271 = vld [vmem:[#allocation6 + $0x50] sm:$0xf]
    %v272 = vld [vmem:[#allocation6 + $0x54] sm:$0xff]
    %v273 = vld [vmem:[#allocation6 + $0x5c] sm:$0xf]
    %v274 = vld [vmem:[#allocation6 + $0x60] sm:$0xff]
    %v275 = vld [vmem:[#allocation6 + $0x68] sm:$0xf]
    %v276 = vld [vmem:[#allocation6 + $0x6c] sm:$0xff]
    %v277 = vld [vmem:[#allocation6 + $0x74] sm:$0xf]
    %v278 = vld [vmem:[#allocation6 + $0x78] sm:$0xff]
    %v279 = vld [vmem:[#allocation6 + $0x80] sm:$0xf]
    %v280 = vld [vmem:[#allocation6 + $0x84] sm:$0xff]
    %v281 = vld [vmem:[#allocation6 + $0x8c] sm:$0xf]
    %v282 = vld [vmem:[#allocation6 + $0x90] sm:$0xff]
    %v283 = vld [vmem:[#allocation6 + $0x98] sm:$0xf]
    %v284 = vld [vmem:[#allocation6 + $0x9c] sm:$0xff]
    %v285 = vld [vmem:[#allocation6 + $0xa4] sm:$0xf]
    %v286 = vld [vmem:[#allocation6 + $0xa8] sm:$0xff]
    %v287 = vld [vmem:[#allocation6 + $0xb0] sm:$0xf]
    %v288 = vld [vmem:[#allocation6 + $0xb4] sm:$0xff]
    %v289 = vld [vmem:[#allocation6 + $0xbc] sm:$0xf]
    %v290 = vld [vmem:[#allocation6 + $0xc0] sm:$0xff]
    %v291 = vld [vmem:[#allocation6 + $0xc8] sm:$0xf]
    %v292 = vld [vmem:[#allocation6 + $0xcc] sm:$0xff]
    %v293 = vld [vmem:[#allocation6 + $0xd4] sm:$0xf]
    %v294 = vld [vmem:[#allocation6 + $0xd8] sm:$0xff]
    %v295 = vld [vmem:[#allocation6 + $0xe0] sm:$0xf]
    %v296 = vld [vmem:[#allocation6 + $0xe4] sm:$0xff]
    %v297 = vld [vmem:[#allocation6 + $0xec] sm:$0xf]
    %v298 = vld [vmem:[#allocation6 + $0xf0] sm:$0xff]
    %v299 = vld [vmem:[#allocation6 + $0xf8] sm:$0xf]
    %v300 = vld [vmem:[#allocation6 + $0xfc] sm:$0xff]
    %v301 = vld [vmem:[#allocation6 + $0x104] sm:$0xf]
    %v302 = vld [vmem:[#allocation6 + $0x108] sm:$0xff]
    %v303 = vld [vmem:[#allocation6 + $0x110] sm:$0xf]
    %v304 = vld [vmem:[#allocation6 + $0x114] sm:$0xff]
    %v305 = vld [vmem:[#allocation6 + $0x11c] sm:$0xf]
    %v306 = vld [vmem:[#allocation6 + $0x120] sm:$0xff]
    %v307 = vld [vmem:[#allocation6 + $0x128] sm:$0xf]
    %v308 = vld [vmem:[#allocation6 + $0x12c] sm:$0xff]
    %v309 = vld [vmem:[#allocation6 + $0x134] sm:$0xf]
    %v310 = vld [vmem:[#allocation6 + $0x138] sm:$0xff]
    %v311 = vld [vmem:[#allocation6 + $0x140] sm:$0xf]
    %v312 = vld [vmem:[#allocation6 + $0x144] sm:$0xff]
    %v313 = vld [vmem:[#allocation6 + $0x14c] sm:$0xf]
    %v314 = vld [vmem:[#allocation6 + $0x150] sm:$0xff]
    %v315 = vld [vmem:[#allocation6 + $0x158] sm:$0xf]
    %v316 = vld [vmem:[#allocation6 + $0x15c] sm:$0xff]
    %v317 = vld [vmem:[#allocation6 + $0x164] sm:$0xf]
    %v318 = vld [vmem:[#allocation6 + $0x168] sm:$0xff]
    %v319 = vld [vmem:[#allocation6 + $0x170] sm:$0xf]
    %v320 = vld [vmem:[#allocation6 + $0x174] sm:$0xff]
    %v321 = vld [vmem:[#allocation6 + $0x17c] sm:$0xf]
    %v322 = vld [vmem:[#allocation6 + $0x180] sm:$0xff]
    %v323 = vld [vmem:[#allocation6 + $0x188] sm:$0xf]
    %v324 = vld [vmem:[#allocation6 + $0x18c] sm:$0xff]
    %v325 = vld [vmem:[#allocation6 + $0x194] sm:$0xf]
    %v326 = vld [vmem:[#allocation6 + $0x198] sm:$0xff]
    %v327 = vld [vmem:[#allocation6 + $0x1a0] sm:$0xf]
    %v328 = vld [vmem:[#allocation6 + $0x1a4] sm:$0xff]
    %v329 = vld [vmem:[#allocation6 + $0x1ac] sm:$0xf]
    %v330 = vld [vmem:[#allocation6 + $0x1b0] sm:$0xff]
    %v331 = vld [vmem:[#allocation6 + $0x1b8] sm:$0xf]
    %v332 = vld [vmem:[#allocation6 + $0x1bc] sm:$0xff]
    %v333 = vld [vmem:[#allocation6 + $0x1c4] sm:$0xf]
    %v334 = vld [vmem:[#allocation6 + $0x1c8] sm:$0xff]
    %v335 = vld [vmem:[#allocation6 + $0x1d0] sm:$0xf]
    %v336 = vld [vmem:[#allocation6 + $0x1d4] sm:$0xff]
    %v337 = vld [vmem:[#allocation6 + $0x1dc] sm:$0xf]
    %v338 = vld [vmem:[#allocation6 + $0x1e0] sm:$0xff]
    %v339 = vld [vmem:[#allocation6 + $0x1e8] sm:$0xf]
    %v340 = vld [vmem:[#allocation6 + $0x1ec] sm:$0xff]
    %v341 = vld [vmem:[#allocation6 + $0x1f4] sm:$0xf]
    %v342 = vld [vmem:[#allocation6 + $0x1f8] sm:$0xff]
    %v343 = vld [vmem:[#allocation6 + $0x200] sm:$0xf]
    %v344 = vld [vmem:[#allocation6 + $0x204] sm:$0xff]
    %v345 = vld [vmem:[#allocation6 + $0x20c] sm:$0xf]
    %v346 = vld [vmem:[#allocation6 + $0x210] sm:$0xff]
    %v347 = vld [vmem:[#allocation6 + $0x218] sm:$0xf]
    %v348 = vld [vmem:[#allocation6 + $0x21c] sm:$0xff]
    %v349 = vld [vmem:[#allocation6 + $0x224] sm:$0xf]
    %v350 = vld [vmem:[#allocation6 + $0x228] sm:$0xff]
    %v351 = vld [vmem:[#allocation6 + $0x230] sm:$0xf]
    %v352 = vld [vmem:[#allocation6 + $0x234] sm:$0xff]
    %v353 = vld [vmem:[#allocation6 + $0x23c] sm:$0xf]
    %v354 = vld [vmem:[#allocation6 + $0x240] sm:$0xff]
    %v355 = vld [vmem:[#allocation6 + $0x248] sm:$0xf]
    %v356 = vld [vmem:[#allocation6 + $0x24c] sm:$0xff]
    %v357 = vld [vmem:[#allocation6 + $0x254] sm:$0xf]
    %v358 = vld [vmem:[%s4] sm:$0x7]
    %v360 = vlaneseq
    %v361 = vshrl.u32 %v360, 7
    %v362 = vsub.s32 0, %v361
    %v363 = vrot.slane %v358, %v362
    %v364 = vlaneseq
    %v365 = vshrl.u32 %v364, 7
    %v366 = vsub.s32 1, %v365
    %v367 = vrot.slane %v358, %v366
    %v368 = vlaneseq
    %v369 = vshrl.u32 %v368, 7
    %v370 = vsub.s32 2, %v369
    %v371 = vrot.slane %v358, %v370
    %v475 = vunpack.c.l.b16 %v258
    %v476 = vunpack.c.h.b16 %v258
    %v477 = vunpack.c.l.b16 %v259
    %v478 = vunpack.c.l.b16 %v260
    %v479 = vunpack.c.h.b16 %v260
    %v480 = vunpack.c.l.b16 %v261
    %v481 = vunpack.c.l.b16 %v262
    %v482 = vunpack.c.h.b16 %v262
    %v483 = vunpack.c.l.b16 %v263
    %v484 = vunpack.c.l.b16 %v264
    %v485 = vunpack.c.h.b16 %v264
    %v486 = vunpack.c.l.b16 %v265
    %v487 = vunpack.c.l.b16 %v266
    %v488 = vunpack.c.h.b16 %v266
    %v489 = vunpack.c.l.b16 %v267
    %v490 = vunpack.c.l.b16 %v268
    %v491 = vunpack.c.h.b16 %v268
    %v492 = vunpack.c.l.b16 %v269
    %v493 = vunpack.c.l.b16 %v270
    %v494 = vunpack.c.h.b16 %v270
    %v495 = vunpack.c.l.b16 %v271
    %v496 = vunpack.c.l.b16 %v272
    %v497 = vunpack.c.h.b16 %v272
    %v498 = vunpack.c.l.b16 %v273
    %v499 = vunpack.c.l.b16 %v274
    %v500 = vunpack.c.h.b16 %v274
    %v501 = vunpack.c.l.b16 %v275
    %v502 = vunpack.c.l.b16 %v276
    %v503 = vunpack.c.h.b16 %v276
    %v504 = vunpack.c.l.b16 %v277
    %v505 = vunpack.c.l.b16 %v278
    %v506 = vunpack.c.h.b16 %v278
    %v507 = vunpack.c.l.b16 %v279
    %v508 = vunpack.c.l.b16 %v280
    %v509 = vunpack.c.h.b16 %v280
    %v510 = vunpack.c.l.b16 %v281
    %v511 = vunpack.c.l.b16 %v282
    %v512 = vunpack.c.h.b16 %v282
    %v513 = vunpack.c.l.b16 %v283
    %v514 = vunpack.c.l.b16 %v284
    %v515 = vunpack.c.h.b16 %v284
    %v516 = vunpack.c.l.b16 %v285
    %v517 = vunpack.c.l.b16 %v286
    %v518 = vunpack.c.h.b16 %v286
    %v519 = vunpack.c.l.b16 %v287
    %v520 = vunpack.c.l.b16 %v288
    %v521 = vunpack.c.h.b16 %v288
    %v522 = vunpack.c.l.b16 %v289
    %v523 = vunpack.c.l.b16 %v290
    %v524 = vunpack.c.h.b16 %v290
    %v525 = vunpack.c.l.b16 %v291
    %v526 = vunpack.c.l.b16 %v292
    %v527 = vunpack.c.h.b16 %v292
    %v528 = vunpack.c.l.b16 %v293
    %v529 = vunpack.c.l.b16 %v294
    %v530 = vunpack.c.h.b16 %v294
    %v531 = vunpack.c.l.b16 %v295
    %v532 = vunpack.c.l.b16 %v296
    %v533 = vunpack.c.h.b16 %v296
    %v534 = vunpack.c.l.b16 %v297
    %v535 = vunpack.c.l.b16 %v298
    %v536 = vunpack.c.h.b16 %v298
    %v537 = vunpack.c.l.b16 %v299
    %v538 = vunpack.c.l.b16 %v300
    %v539 = vunpack.c.h.b16 %v300
    %v540 = vunpack.c.l.b16 %v301
    %v541 = vunpack.c.l.b16 %v302
    %v542 = vunpack.c.h.b16 %v302
    %v543 = vunpack.c.l.b16 %v303
    %v544 = vunpack.c.l.b16 %v304
    %v545 = vunpack.c.h.b16 %v304
    %v546 = vunpack.c.l.b16 %v305
    %v547 = vunpack.c.l.b16 %v306
    %v548 = vunpack.c.h.b16 %v306
    %v549 = vunpack.c.l.b16 %v307
    %v550 = vunpack.c.l.b16 %v308
    %v551 = vunpack.c.h.b16 %v308
    %v552 = vunpack.c.l.b16 %v309
    %v553 = vunpack.c.l.b16 %v310
    %v554 = vunpack.c.h.b16 %v310
    %v555 = vunpack.c.l.b16 %v311
    %v556 = vunpack.c.l.b16 %v312
    %v557 = vunpack.c.h.b16 %v312
    %v558 = vunpack.c.l.b16 %v313
    %v559 = vunpack.c.l.b16 %v314
    %v560 = vunpack.c.h.b16 %v314
    %v561 = vunpack.c.l.b16 %v315
    %v562 = vunpack.c.l.b16 %v316
    %v563 = vunpack.c.h.b16 %v316
    %v564 = vunpack.c.l.b16 %v317
    %v565 = vunpack.c.l.b16 %v318
    %v566 = vunpack.c.h.b16 %v318
    %v567 = vunpack.c.l.b16 %v319
    %v568 = vunpack.c.l.b16 %v320
    %v569 = vunpack.c.h.b16 %v320
    %v570 = vunpack.c.l.b16 %v321
    %v571 = vunpack.c.l.b16 %v322
    %v572 = vunpack.c.h.b16 %v322
    %v573 = vunpack.c.l.b16 %v323
    %v574 = vunpack.c.l.b16 %v324
    %v575 = vunpack.c.h.b16 %v324
    %v576 = vunpack.c.l.b16 %v325
    %v577 = vunpack.c.l.b16 %v326
    %v578 = vunpack.c.h.b16 %v326
    %v579 = vunpack.c.l.b16 %v327
    %v580 = vunpack.c.l.b16 %v328
    %v581 = vunpack.c.h.b16 %v328
    %v582 = vunpack.c.l.b16 %v329
    %v583 = vunpack.c.l.b16 %v330
    %v584 = vunpack.c.h.b16 %v330
    %v585 = vunpack.c.l.b16 %v331
    %v586 = vunpack.c.l.b16 %v332
    %v587 = vunpack.c.h.b16 %v332
    %v588 = vunpack.c.l.b16 %v333
    %v589 = vunpack.c.l.b16 %v334
    %v590 = vunpack.c.h.b16 %v334
    %v591 = vunpack.c.l.b16 %v335
    %v592 = vunpack.c.l.b16 %v336
    %v593 = vunpack.c.h.b16 %v336
    %v594 = vunpack.c.l.b16 %v337
    %v595 = vunpack.c.l.b16 %v338
    %v596 = vunpack.c.h.b16 %v338
    %v597 = vunpack.c.l.b16 %v339
    %v598 = vunpack.c.l.b16 %v340
    %v599 = vunpack.c.h.b16 %v340
    %v600 = vunpack.c.l.b16 %v341
    %v601 = vunpack.c.l.b16 %v342
    %v602 = vunpack.c.h.b16 %v342
    %v603 = vunpack.c.l.b16 %v343
    %v604 = vunpack.c.l.b16 %v344
    %v605 = vunpack.c.h.b16 %v344
    %v606 = vunpack.c.l.b16 %v345
    %v607 = vunpack.c.l.b16 %v346
    %v608 = vunpack.c.h.b16 %v346
    %v609 = vunpack.c.l.b16 %v347
    %v610 = vunpack.c.l.b16 %v348
    %v611 = vunpack.c.h.b16 %v348
    %v612 = vunpack.c.l.b16 %v349
    %v613 = vunpack.c.l.b16 %v350
    %v614 = vunpack.c.h.b16 %v350
    %v615 = vunpack.c.l.b16 %v351
    %v616 = vunpack.c.l.b16 %v352
    %v617 = vunpack.c.h.b16 %v352
    %v618 = vunpack.c.l.b16 %v353
    %v619 = vunpack.c.l.b16 %v354
    %v620 = vunpack.c.h.b16 %v354
    %v621 = vunpack.c.l.b16 %v355
    %v622 = vunpack.c.l.b16 %v356
    %v623 = vunpack.c.h.b16 %v356
    %v624 = vunpack.c.l.b16 %v357
    %v625 = vpack.c.b16 %v478, %v475
    %v626 = vpack.c.b16 %v479, %v476
    %v627 = vpack.c.b16 %v480, %v477
    %v628 = vpack.c.b16 %v484, %v481
    %v629 = vpack.c.b16 %v485, %v482
    %v630 = vpack.c.b16 %v486, %v483
    %v631 = vpack.c.b16 %v490, %v487
    %v632 = vpack.c.b16 %v491, %v488
    %v633 = vpack.c.b16 %v492, %v489
    %v634 = vpack.c.b16 %v496, %v493
    %v635 = vpack.c.b16 %v497, %v494
    %v636 = vpack.c.b16 %v498, %v495
    %v637 = vpack.c.b16 %v502, %v499
    %v638 = vpack.c.b16 %v503, %v500
    %v639 = vpack.c.b16 %v504, %v501
    %v640 = vpack.c.b16 %v508, %v505
    %v641 = vpack.c.b16 %v509, %v506
    %v642 = vpack.c.b16 %v510, %v507
    %v643 = vpack.c.b16 %v514, %v511
    %v644 = vpack.c.b16 %v515, %v512
    %v645 = vpack.c.b16 %v516, %v513
    %v646 = vpack.c.b16 %v520, %v517
    %v647 = vpack.c.b16 %v521, %v518
    %v648 = vpack.c.b16 %v522, %v519
    %v649 = vpack.c.b16 %v526, %v523
    %v650 = vpack.c.b16 %v527, %v524
    %v651 = vpack.c.b16 %v528, %v525
    %v652 = vpack.c.b16 %v532, %v529
    %v653 = vpack.c.b16 %v533, %v530
    %v654 = vpack.c.b16 %v534, %v531
    %v655 = vpack.c.b16 %v538, %v535
    %v656 = vpack.c.b16 %v539, %v536
    %v657 = vpack.c.b16 %v540, %v537
    %v658 = vpack.c.b16 %v544, %v541
    %v659 = vpack.c.b16 %v545, %v542
    %v660 = vpack.c.b16 %v546, %v543
    %v661 = vpack.c.b16 %v550, %v547
    %v662 = vpack.c.b16 %v551, %v548
    %v663 = vpack.c.b16 %v552, %v549
    %v664 = vpack.c.b16 %v556, %v553
    %v665 = vpack.c.b16 %v557, %v554
    %v666 = vpack.c.b16 %v558, %v555
    %v667 = vpack.c.b16 %v562, %v559
    %v668 = vpack.c.b16 %v563, %v560
    %v669 = vpack.c.b16 %v564, %v561
    %v670 = vpack.c.b16 %v568, %v565
    %v671 = vpack.c.b16 %v569, %v566
    %v672 = vpack.c.b16 %v570, %v567
    %v673 = vpack.c.b16 %v574, %v571
    %v674 = vpack.c.b16 %v575, %v572
    %v675 = vpack.c.b16 %v576, %v573
    %v676 = vpack.c.b16 %v580, %v577
    %v677 = vpack.c.b16 %v581, %v578
    %v678 = vpack.c.b16 %v582, %v579
    %v679 = vpack.c.b16 %v586, %v583
    %v680 = vpack.c.b16 %v587, %v584
    %v681 = vpack.c.b16 %v588, %v585
    %v682 = vpack.c.b16 %v592, %v589
    %v683 = vpack.c.b16 %v593, %v590
    %v684 = vpack.c.b16 %v594, %v591
    %v685 = vpack.c.b16 %v598, %v595
    %v686 = vpack.c.b16 %v599, %v596
    %v687 = vpack.c.b16 %v600, %v597
    %v688 = vpack.c.b16 %v604, %v601
    %v689 = vpack.c.b16 %v605, %v602
    %v690 = vpack.c.b16 %v606, %v603
    %v691 = vpack.c.b16 %v610, %v607
    %v692 = vpack.c.b16 %v611, %v608
    %v693 = vpack.c.b16 %v612, %v609
    %v694 = vpack.c.b16 %v616, %v613
    %v695 = vpack.c.b16 %v617, %v614
    %v696 = vpack.c.b16 %v618, %v615
    %v697 = vpack.c.b16 %v622, %v619
    %v698 = vpack.c.b16 %v623, %v620
    %v699 = vpack.c.b16 %v624, %v621
    %vm775 = vcmask 130048
    %v777 = vsel %vm775, %v257, 0
    %779 = vmatprep.subr.bf16.mxu0 %v626
    %780 = vmatpush1.bf16.msra.mxu0 %v625
    %781 = vmatprep.subr.bf16.mxu0 %v629
    %782 = vmatpush1.bf16.msra.mxu0 %v628
    %783 = vmatprep.subr.bf16.mxu0 %v632
    %784 = vmatpush1.bf16.msra.mxu0 %v631
    %785 = vmatprep.subr.bf16.mxu0 %v635
    %786 = vmatpush1.bf16.msra.mxu0 %v634
    %787 = vmatprep.subr.bf16.mxu0 %v638
    %788 = vmatpush1.bf16.msra.mxu0 %v637
    %789 = vmatprep.subr.bf16.mxu0 %v641
    %790 = vmatpush1.bf16.msra.mxu0 %v640
    %791 = vmatprep.subr.bf16.mxu0 %v644
    %792 = vmatpush1.bf16.msra.mxu0 %v643
    %793 = vmatprep.subr.bf16.mxu0 %v647
    %794 = vmatpush1.bf16.msra.mxu0 %v646
    %795 = vmatprep.subr.bf16.mxu0 %v650
    %796 = vmatpush1.bf16.msra.mxu0 %v649
    %797 = vmatprep.subr.bf16.mxu0 %v653
    %798 = vmatpush1.bf16.msra.mxu0 %v652
    %799 = vmatprep.subr.bf16.mxu0 %v656
    %800 = vmatpush1.bf16.msra.mxu0 %v655
    %801 = vmatprep.subr.bf16.mxu0 %v659
    %802 = vmatpush1.bf16.msra.mxu0 %v658
    %803 = vmatprep.subr.bf16.mxu0 %v662
    %804 = vmatpush1.bf16.msra.mxu0 %v661
    %805 = vmatprep.subr.bf16.mxu0 %v665
    %806 = vmatpush1.bf16.msra.mxu0 %v664
    %807 = vmatprep.subr.bf16.mxu0 %v668
    %808 = vmatpush1.bf16.msra.mxu0 %v667
    %809 = vmatprep.subr.bf16.mxu0 %v671
    %810 = vmatpush1.bf16.msra.mxu0 %v670
    %811 = vmatprep.mubr.bf16.mxu0 %v255
    %812 = vmatmul.mubr.bf16.gmra.mrb[0].mxu0 %v254
    %v813 = vpop.f32.mrb[0].mxu0
    %v814 = vadd.f32 %v363, %v813
    %v815 = vpop.f32.mrb[0].mxu0
    %v816 = vadd.f32 %v367, %v815
    %v817 = vpop.f32.mrb[0].mxu0
    %v818 = vpop.f32.mrb[0].mxu0
    %819 = vdwg.mxu0
    %820 = vmatprep.subr.bf16.mxu0 %v674
    %821 = vmatpush1.bf16.msra.mxu0 %v673
    %822 = vmatprep.subr.bf16.mxu0 %v677
    %823 = vmatpush1.bf16.msra.mxu0 %v676
    %824 = vmatprep.subr.bf16.mxu0 %v680
    %825 = vmatpush1.bf16.msra.mxu0 %v679
    %826 = vmatprep.subr.bf16.mxu0 %v683
    %827 = vmatpush1.bf16.msra.mxu0 %v682
    %828 = vmatprep.subr.bf16.mxu0 %v686
    %829 = vmatpush1.bf16.msra.mxu0 %v685
    %830 = vmatprep.subr.bf16.mxu0 %v689
    %831 = vmatpush1.bf16.msra.mxu0 %v688
    %832 = vmatprep.subr.bf16.mxu0 %v692
    %833 = vmatpush1.bf16.msra.mxu0 %v691
    %834 = vmatprep.subr.bf16.mxu0 %v695
    %835 = vmatpush1.bf16.msra.mxu0 %v694
    %836 = vmatprep.subr.bf16.mxu0 %v698
    %837 = vmatpush1.bf16.msra.mxu0 %v697
    %838 = vmatprep.subr.bf16.mxu0 0
    %839 = vmatpush1.bf16.msra.mxu0 0
    %840 = vmatprep.subr.bf16.mxu0 0
    %841 = vmatpush1.bf16.msra.mxu0 0
    %842 = vmatprep.subr.bf16.mxu0 0
    %843 = vmatpush1.bf16.msra.mxu0 0
    %844 = vmatprep.subr.bf16.mxu0 0
    %845 = vmatpush1.bf16.msra.mxu0 0
    %846 = vmatprep.subr.bf16.mxu0 0
    %847 = vmatpush1.bf16.msra.mxu0 0
    %848 = vmatprep.subr.bf16.mxu0 0
    %849 = vmatpush1.bf16.msra.mxu0 0
    %850 = vmatprep.subr.bf16.mxu0 0
    %851 = vmatpush1.bf16.msra.mxu0 0
    %852 = vmatprep.mubr.bf16.mxu0 %v777
    %853 = vmatmul.mubr.bf16.gmra.mrb[0].mxu0 %v256
    %v854 = vpop.f32.mrb[0].mxu0
    %v855 = vadd.f32 %v814, %v854
    %v856 = vpop.f32.mrb[0].mxu0
    %v857 = vadd.f32 %v816, %v856
    %v858 = vpop.f32.mrb[0].mxu0
    %v859 = vpop.f32.mrb[0].mxu0
    %860 = vdwg.mxu0
    %861 = vmatprep.subr.bf16.mxu0 0
    %862 = vmatpush1.bf16.msra.mxu0 %v627
    %863 = vmatprep.subr.bf16.mxu0 0
    %864 = vmatpush1.bf16.msra.mxu0 %v630
    %865 = vmatprep.subr.bf16.mxu0 0
    %866 = vmatpush1.bf16.msra.mxu0 %v633
    %867 = vmatprep.subr.bf16.mxu0 0
    %868 = vmatpush1.bf16.msra.mxu0 %v636
    %869 = vmatprep.subr.bf16.mxu0 0
    %870 = vmatpush1.bf16.msra.mxu0 %v639
    %871 = vmatprep.subr.bf16.mxu0 0
    %872 = vmatpush1.bf16.msra.mxu0 %v642
    %873 = vmatprep.subr.bf16.mxu0 0
    %874 = vmatpush1.bf16.msra.mxu0 %v645
    %875 = vmatprep.subr.bf16.mxu0 0
    %876 = vmatpush1.bf16.msra.mxu0 %v648
    %877 = vmatprep.subr.bf16.mxu0 0
    %878 = vmatpush1.bf16.msra.mxu0 %v651
    %879 = vmatprep.subr.bf16.mxu0 0
    %880 = vmatpush1.bf16.msra.mxu0 %v654
    %881 = vmatprep.subr.bf16.mxu0 0
    %882 = vmatpush1.bf16.msra.mxu0 %v657
    %883 = vmatprep.subr.bf16.mxu0 0
    %884 = vmatpush1.bf16.msra.mxu0 %v660
    %885 = vmatprep.subr.bf16.mxu0 0
    %886 = vmatpush1.bf16.msra.mxu0 %v663
    %887 = vmatprep.subr.bf16.mxu0 0
    %888 = vmatpush1.bf16.msra.mxu0 %v666
    %889 = vmatprep.subr.bf16.mxu0 0
    %890 = vmatpush1.bf16.msra.mxu0 %v669
    %891 = vmatprep.subr.bf16.mxu0 0
    %892 = vmatpush1.bf16.msra.mxu0 %v672
    %893 = vmatprep.mubr.bf16.mxu0 %v255
    %894 = vmatmul.mubr.bf16.gmra.mrb[0].mxu0 %v254
    %v895 = vpop.f32.mrb[0].mxu0
    %v896 = vadd.f32 %v371, %v895
    %v897 = vpop.f32.mrb[0].mxu0
    %v898 = vpop.f32.mrb[0].mxu0
    %v899 = vpop.f32.mrb[0].mxu0
    %900 = vdwg.mxu0
    %901 = vmatprep.subr.bf16.mxu0 0
    %902 = vmatpush1.bf16.msra.mxu0 %v675
    %903 = vmatprep.subr.bf16.mxu0 0
    %904 = vmatpush1.bf16.msra.mxu0 %v678
    %905 = vmatprep.subr.bf16.mxu0 0
    %906 = vmatpush1.bf16.msra.mxu0 %v681
    %907 = vmatprep.subr.bf16.mxu0 0
    %908 = vmatpush1.bf16.msra.mxu0 %v684
    %909 = vmatprep.subr.bf16.mxu0 0
    %910 = vmatpush1.bf16.msra.mxu0 %v687
    %911 = vmatprep.subr.bf16.mxu0 0
    %912 = vmatpush1.bf16.msra.mxu0 %v690
    %913 = vmatprep.subr.bf16.mxu0 0
    %914 = vmatpush1.bf16.msra.mxu0 %v693
    %915 = vmatprep.subr.bf16.mxu0 0
    %916 = vmatpush1.bf16.msra.mxu0 %v696
    %917 = vmatprep.subr.bf16.mxu0 0
    %918 = vmatpush1.bf16.msra.mxu0 %v699
    %919 = vmatprep.subr.bf16.mxu0 0
    %920 = vmatpush1.bf16.msra.mxu0 0
    %921 = vmatprep.subr.bf16.mxu0 0
    %922 = vmatpush1.bf16.msra.mxu0 0
    %923 = vmatprep.subr.bf16.mxu0 0
    %924 = vmatpush1.bf16.msra.mxu0 0
    %925 = vmatprep.subr.bf16.mxu0 0
    %926 = vmatpush1.bf16.msra.mxu0 0
    %927 = vmatprep.subr.bf16.mxu0 0
    %928 = vmatpush1.bf16.msra.mxu0 0
    %929 = vmatprep.subr.bf16.mxu0 0
    %930 = vmatpush1.bf16.msra.mxu0 0
    %931 = vmatprep.subr.bf16.mxu0 0
    %932 = vmatpush1.bf16.msra.mxu0 0
    %933 = vmatprep.mubr.bf16.mxu0 %v777
    %934 = vmatmul.mubr.bf16.gmra.mrb[0].mxu0 %v256
    %v935 = vpop.f32.mrb[0].mxu0
    %v936 = vadd.f32 %v896, %v935
    %v937 = vpop.f32.mrb[0].mxu0
    %v938 = vpop.f32.mrb[0].mxu0
    %v939 = vpop.f32.mrb[0].mxu0
    %940 = vdwg.mxu0
    %v941 = vmax.f32 %v855, 0.0
    %v942 = vmax.f32 %v857, 0.0
    %v943 = vmax.f32 %v936, 0.0
    %v944 = vpack.c.bf16 %v941, %v941
    %v945 = vpack.c.bf16 %v942, %v942
    %v946 = vpack.c.bf16 %v943, %v943
    %v947 = vld [vmem:[#allocation7] sm:$0xf]
    %v948 = vld [vmem:[#allocation7 + $0x4] sm:$0xf]
    %v949 = vld [vmem:[#allocation7 + $0x8] sm:$0xf]
    %v950 = vld [vmem:[#allocation7 + $0xc] sm:$0xf]
    %v951 = vld [vmem:[#allocation7 + $0x10] sm:$0xf]
    %v952 = vld [vmem:[#allocation7 + $0x14] sm:$0xf]
    %v953 = vld [vmem:[#allocation7 + $0x18] sm:$0xf]
    %v954 = vld [vmem:[#allocation7 + $0x1c] sm:$0xf]
    %v955 = vld [vmem:[#allocation7 + $0x20] sm:$0xf]
    %v956 = vld [vmem:[#allocation7 + $0x24] sm:$0xf]
    %v957 = vld [vmem:[#allocation7 + $0x28] sm:$0xf]
    %v958 = vld [vmem:[#allocation7 + $0x2c] sm:$0xf]
    %v959 = vld [vmem:[#allocation7 + $0x30] sm:$0xf]
    %v960 = vld [vmem:[#allocation7 + $0x34] sm:$0xf]
    %v961 = vld [vmem:[#allocation7 + $0x38] sm:$0xf]
    %v962 = vld [vmem:[#allocation7 + $0x3c] sm:$0xf]
    %v963 = vld [vmem:[#allocation7 + $0x40] sm:$0xf]
    %v964 = vld [vmem:[#allocation7 + $0x44] sm:$0xf]
    %v965 = vld [vmem:[#allocation7 + $0x48] sm:$0xf]
    %v966 = vld [vmem:[#allocation7 + $0x4c] sm:$0xf]
    %v967 = vld [vmem:[#allocation7 + $0x50] sm:$0xf]
    %v968 = vld [vmem:[#allocation7 + $0x54] sm:$0xf]
    %v969 = vld [vmem:[#allocation7 + $0x58] sm:$0xf]
    %v970 = vld [vmem:[#allocation7 + $0x5c] sm:$0xf]
    %v971 = vld [vmem:[#allocation7 + $0x60] sm:$0xf]
    %v972 = vld [vmem:[#allocation7 + $0x64] sm:$0xf]
    %v973 = vld [vmem:[#allocation7 + $0x68] sm:$0xf]
    %v974 = vld [vmem:[#allocation7 + $0x6c] sm:$0xf]
    %v975 = vld [vmem:[#allocation7 + $0x70] sm:$0xf]
    %v976 = vld [vmem:[#allocation7 + $0x74] sm:$0xf]
    %v977 = vld [vmem:[#allocation7 + $0x78] sm:$0xf]
    %v978 = vld [vmem:[#allocation7 + $0x7c] sm:$0xf]
    %v979 = vld [vmem:[#allocation7 + $0x80] sm:$0xf]
    %v980 = vld [vmem:[#allocation7 + $0x84] sm:$0xf]
    %v981 = vld [vmem:[#allocation7 + $0x88] sm:$0xf]
    %v982 = vld [vmem:[#allocation7 + $0x8c] sm:$0xf]
    %v983 = vld [vmem:[#allocation7 + $0x90] sm:$0xf]
    %v984 = vld [vmem:[#allocation7 + $0x94] sm:$0x3]
    %v985 = vld [vmem:[%s6] sm:$0x1]
    %v987 = vlaneseq
    %v988 = vshrl.u32 %v987, 7
    %v989 = vsub.s32 0, %v988
    %v990 = vrot.slane %v985, %v989
    %v1030 = vunpack.c.l.b16 %v947
    %v1031 = vunpack.c.l.b16 %v948
    %v1032 = vunpack.c.l.b16 %v949
    %v1033 = vunpack.c.l.b16 %v950
    %v1034 = vunpack.c.l.b16 %v951
    %v1035 = vunpack.c.l.b16 %v952
    %v1036 = vunpack.c.l.b16 %v953
    %v1037 = vunpack.c.l.b16 %v954
    %v1038 = vunpack.c.l.b16 %v955
    %v1039 = vunpack.c.l.b16 %v956
    %v1040 = vunpack.c.l.b16 %v957
    %v1041 = vunpack.c.l.b16 %v958
    %v1042 = vunpack.c.l.b16 %v959
    %v1043 = vunpack.c.l.b16 %v960
    %v1044 = vunpack.c.l.b16 %v961
    %v1045 = vunpack.c.l.b16 %v962
    %v1046 = vunpack.c.l.b16 %v963
    %v1047 = vunpack.c.l.b16 %v964
    %v1048 = vunpack.c.l.b16 %v965
    %v1049 = vunpack.c.l.b16 %v966
    %v1050 = vunpack.c.l.b16 %v967
    %v1051 = vunpack.c.l.b16 %v968
    %v1052 = vunpack.c.l.b16 %v969
    %v1053 = vunpack.c.l.b16 %v970
    %v1054 = vunpack.c.l.b16 %v971
    %v1055 = vunpack.c.l.b16 %v972
    %v1056 = vunpack.c.l.b16 %v973
    %v1057 = vunpack.c.l.b16 %v974
    %v1058 = vunpack.c.l.b16 %v975
    %v1059 = vunpack.c.l.b16 %v976
    %v1060 = vunpack.c.l.b16 %v977
    %v1061 = vunpack.c.l.b16 %v978
    %v1062 = vunpack.c.l.b16 %v979
    %v1063 = vunpack.c.l.b16 %v980
    %v1064 = vunpack.c.l.b16 %v981
    %v1065 = vunpack.c.l.b16 %v982
    %v1066 = vunpack.c.l.b16 %v983
    %v1067 = vunpack.c.l.b16 %v984
    %v1068 = vpack.c.b16 %v1031, %v1030
    %v1069 = vpack.c.b16 %v1033, %v1032
    %v1070 = vpack.c.b16 %v1035, %v1034
    %v1071 = vpack.c.b16 %v1037, %v1036
    %v1072 = vpack.c.b16 %v1039, %v1038
    %v1073 = vpack.c.b16 %v1041, %v1040
    %v1074 = vpack.c.b16 %v1043, %v1042
    %v1075 = vpack.c.b16 %v1045, %v1044
    %v1076 = vpack.c.b16 %v1047, %v1046
    %v1077 = vpack.c.b16 %v1049, %v1048
    %v1078 = vpack.c.b16 %v1051, %v1050
    %v1079 = vpack.c.b16 %v1053, %v1052
    %v1080 = vpack.c.b16 %v1055, %v1054
    %v1081 = vpack.c.b16 %v1057, %v1056
    %v1082 = vpack.c.b16 %v1059, %v1058
    %v1083 = vpack.c.b16 %v1061, %v1060
    %v1084 = vpack.c.b16 %v1063, %v1062
    %v1085 = vpack.c.b16 %v1065, %v1064
    %v1086 = vpack.c.b16 %v1067, %v1066
    %vm1105 = vcmask 359424
    %v1107 = vsel %vm1105, %v946, 0
    %vm1109 = vcmask 1045504
    %v1111 = vsel %vm1109, %v1086, 0
    %1113 = vmatprep.subr.bf16.mxu0 0
    %1114 = vmatpush1.bf16.msra.mxu0 %v1068
    %1115 = vmatprep.subr.bf16.mxu0 0
    %1116 = vmatpush1.bf16.msra.mxu0 %v1069
    %1117 = vmatprep.subr.bf16.mxu0 0
    %1118 = vmatpush1.bf16.msra.mxu0 %v1070
    %1119 = vmatprep.subr.bf16.mxu0 0
    %1120 = vmatpush1.bf16.msra.mxu0 %v1071
    %1121 = vmatprep.subr.bf16.mxu0 0
    %1122 = vmatpush1.bf16.msra.mxu0 %v1072
    %1123 = vmatprep.subr.bf16.mxu0 0
    %1124 = vmatpush1.bf16.msra.mxu0 %v1073
    %1125 = vmatprep.subr.bf16.mxu0 0
    %1126 = vmatpush1.bf16.msra.mxu0 %v1074
    %1127 = vmatprep.subr.bf16.mxu0 0
    %1128 = vmatpush1.bf16.msra.mxu0 %v1075
    %1129 = vmatprep.subr.bf16.mxu0 0
    %1130 = vmatpush1.bf16.msra.mxu0 %v1076
    %1131 = vmatprep.subr.bf16.mxu0 0
    %1132 = vmatpush1.bf16.msra.mxu0 %v1077
    %1133 = vmatprep.subr.bf16.mxu0 0
    %1134 = vmatpush1.bf16.msra.mxu0 %v1078
    %1135 = vmatprep.subr.bf16.mxu0 0
    %1136 = vmatpush1.bf16.msra.mxu0 %v1079
    %1137 = vmatprep.subr.bf16.mxu0 0
    %1138 = vmatpush1.bf16.msra.mxu0 %v1080
    %1139 = vmatprep.subr.bf16.mxu0 0
    %1140 = vmatpush1.bf16.msra.mxu0 %v1081
    %1141 = vmatprep.subr.bf16.mxu0 0
    %1142 = vmatpush1.bf16.msra.mxu0 %v1082
    %1143 = vmatprep.subr.bf16.mxu0 0
    %1144 = vmatpush1.bf16.msra.mxu0 %v1083
    %1145 = vmatprep.mubr.bf16.mxu0 %v945
    %1146 = vmatmul.mubr.bf16.gmra.mrb[0].mxu0 %v944
    %v1147 = vpop.f32.mrb[0].mxu0
    %v1148 = vadd.f32 %v990, %v1147
    %v1149 = vpop.f32.mrb[0].mxu0
    %v1150 = vpop.f32.mrb[0].mxu0
    %v1151 = vpop.f32.mrb[0].mxu0
    %1152 = vdwg.mxu0
    %1153 = vmatprep.subr.bf16.mxu0 0
    %1154 = vmatpush1.bf16.msra.mxu0 %v1084
    %1155 = vmatprep.subr.bf16.mxu0 0
    %1156 = vmatpush1.bf16.msra.mxu0 %v1085
    %1157 = vmatprep.subr.bf16.mxu0 0
    %1158 = vmatpush1.bf16.msra.mxu0 %v1111
    %1159 = vmatprep.subr.bf16.mxu0 0
    %1160 = vmatpush1.bf16.msra.mxu0 0
    %1161 = vmatprep.subr.bf16.mxu0 0
    %1162 = vmatpush1.bf16.msra.mxu0 0
    %1163 = vmatprep.subr.bf16.mxu0 0
    %1164 = vmatpush1.bf16.msra.mxu0 0
    %1165 = vmatprep.subr.bf16.mxu0 0
    %1166 = vmatpush1.bf16.msra.mxu0 0
    %1167 = vmatprep.subr.bf16.mxu0 0
    %1168 = vmatpush1.bf16.msra.mxu0 0
    %1169 = vmatprep.subr.bf16.mxu0 0
    %1170 = vmatpush1.bf16.msra.mxu0 0
    %1171 = vmatprep.subr.bf16.mxu0 0
    %1172 = vmatpush1.bf16.msra.mxu0 0
    %1173 = vmatprep.subr.bf16.mxu0 0
    %1174 = vmatpush1.bf16.msra.mxu0 0
    %1175 = vmatprep.subr.bf16.mxu0 0
    %1176 = vmatpush1.bf16.msra.mxu0 0
    %1177 = vmatprep.subr.bf16.mxu0 0
    %1178 = vmatpush1.bf16.msra.mxu0 0
    %1179 = vmatprep.subr.bf16.mxu0 0
    %1180 = vmatpush1.bf16.msra.mxu0 0
    %1181 = vmatprep.subr.bf16.mxu0 0
    %1182 = vmatpush1.bf16.msra.mxu0 0
    %1183 = vmatprep.subr.bf16.mxu0 0
    %1184 = vmatpush1.bf16.msra.mxu0 0
    %1185 = vmatprep.mubr.bf16.mxu0 0
    %1186 = vmatmul.mubr.bf16.gmra.mrb[0].mxu0 %v1107
    %v1187 = vpop.f32.mrb[0].mxu0
    %v1188 = vadd.f32 %v1148, %v1187
    %v1189 = vpop.f32.mrb[0].mxu0
    %v1190 = vpop.f32.mrb[0].mxu0
    %v1191 = vpop.f32.mrb[0].mxu0
    %1192 = vdwg.mxu0
    %v1193 = vtanh.pop %v1188
    %1194 = vst [vmem:[%s7] sm:$0x3] %v1193
    // Predicated region
    $region46: #{_actor_forward.1} parent=1 // pred_check
      _
    $region47: #{_actor_forward.1} parent=1 // pred_check_branch
      %1196 = sbr.rel (0) target = $region49
    $region48: #{_actor_forward.1} parent=1 // pred_region
      _
    $region49: #{_actor_forward.1} parent=1 // pred_fallthru
      _
    // Predicated region
    $region50: #{_actor_forward.1} parent=1 // pred_check
      _
    $region51: #{_actor_forward.1} parent=1 // pred_check_branch
      %1198 = sbr.rel (0) target = $region53
    $region52: #{_actor_forward.1} parent=1 // pred_region
      _
    $region53: #{_actor_forward.1} parent=1 // pred_fallthru
      _
    %1199 = vsyncpa [#allocation3], 1
    %1200 = vsyncpa [#allocation5], 1
    %1201 = vsyncpa [#allocation8], 1

</llo_original>
